<compile_context>
chip_gen: v7x
topology: tpu7x:2x2x1
jax: 0.10.0
libtpu: 0.0.40
codegen_flags: <defaults>
</compile_context>

<pallas_src>
import functools

import numpy as np
import jax
import jax.numpy as jnp
from jax.experimental import pallas as pl
from jax.experimental.pallas import tpu as pltpu


def _controller_kernel(
    # inputs (whole-array VMEM refs; single invocation, no grid)
    q_ref,        # (B, d)        q_encoding
    lstm_ref,     # (B, S, d)     lstm_seq, batch-major
    seqlen_ref,   # (B, 1) int32  sequence lengths
    gumbel_ref,   # (T, B, M)     gumbel noise for all steps
    c_init_ref,   # (1, d)
    wq_ref,       # (d, T*d)      all per-step fc_q_t weights, concatenated on out dim
    bq_ref,       # (1, T*d)      all per-step fc_q_t biases
    wqc_q_ref,    # (d, d)        fc_q_cat_c weight rows acting on q_i
    wqc_c_ref,    # (d, d)        fc_q_cat_c weight rows acting on c_prev
    bqc_ref,      # (1, d)
    w1_ref, b1_ref,   # (d, d), (1, d)   fc_module_weight[0]
    w2_ref, b2_ref,   # (d, M), (1, M)   fc_module_weight[2]
    wcv_ref,      # (1, d)        fc_raw_cv weight
    bcv_ref,      # (1, 1)        fc_raw_cv bias
    # outputs
    logit_ref,    # (T, B, M)
    prob_ref,     # (T, B, M)
    c_ref,        # (T, B, d)
    cv_ref,       # (T, B, S)     lane-dense (S last); matches PyTorch stacking
    *,
    T: int,
    d: int,
    use_gumbel: bool,
):
    q = q_ref[...]                                   # (B, d)
    lstm = lstm_ref[...]                             # (B, S, d)
    B, S, _ = lstm.shape

    # ---- step-invariant prologue (hoisted out of the recurrence) -----------
    # all T q_i projections in one wide matmul: (B, d) @ (d, T*d)
    q_all = (jnp.dot(q, wq_ref[...], preferred_element_type=jnp.float32)
             + bq_ref[...])                          # (B, T*d)

    # validity mask over sequence positions (computed once)
    cols = jax.lax.broadcasted_iota(jnp.int32, (B, S), 1)
    valid = cols < seqlen_ref[...]                   # (B, S)

    wcv = wcv_ref[...]                               # (1, d)
    bcv = bcv_ref[...]                               # (1, 1)
    neg_big = jnp.float32(-1e30)                     # finite: avoids inf-inf NaNs

    wqc_q = wqc_q_ref[...]
    wqc_c = wqc_c_ref[...]
    bqc = bqc_ref[...]
    w1 = w1_ref[...]
    b1 = b1_ref[...]
    w2 = w2_ref[...]
    b2 = b2_ref[...]

    # ---- unrolled max_step recurrence (c_prev carried in registers) --------
    c_prev = jnp.broadcast_to(c_init_ref[...], (B, d))
    for t in range(T):
        q_i = q_all[:, t * d:(t + 1) * d]            # (B, d), static slice

        # cq_i = fc_q_cat_c(concat([q_i, c_prev], dim=1)) with the concat
        # folded into two matmuls sharing bias bqc.
        cq_i = (jnp.dot(q_i, wqc_q, preferred_element_type=jnp.float32)
                + jnp.dot(c_prev, wqc_c, preferred_element_type=jnp.float32)
                + bqc)                               # (B, d)

        # module_logit = Linear(ReLU(Linear(cq_i)))
        h = jnp.maximum(
            jnp.dot(cq_i, w1, preferred_element_type=jnp.float32) + b1, 0.0)
        logit = jnp.dot(h, w2, preferred_element_type=jnp.float32) + b2   # (B, M)
        logit_ref[t] = logit

        # module_prob = gumbel_softmax(logit, tau=1, hard=use_gumbel)
        y = logit + gumbel_ref[t]
        y = y - jnp.max(y, axis=-1, keepdims=True)
        ey = jnp.exp(y)
        soft = ey / jnp.sum(ey, axis=-1, keepdims=True)
        if use_gumbel:
            # forward value of the straight-through hard sample = one-hot(argmax)
            # TODO(synk): backward of hard gumbel-softmax (straight-through VJP)
            # is not implemented; forward value only.
            idx = jnp.argmax(y, axis=-1)[:, None]
            mcols = jax.lax.broadcasted_iota(jnp.int32, soft.shape, 1)
            prob = jnp.where(mcols == idx, 1.0, 0.0).astype(soft.dtype)
        else:
            prob = soft
        prob_ref[t] = prob

        # attention over the sequence (fc_raw_cv weight folded into cq_i first)
        cqw = cq_i * wcv                                          # (B, d)
        raw = jnp.sum(lstm * cqw[:, None, :], axis=-1) + bcv      # (B, S)
        raw = jnp.where(valid, raw, neg_big)
        m = jnp.max(raw, axis=-1, keepdims=True)
        e2 = jnp.exp(raw - m)
        cv = e2 / jnp.sum(e2, axis=-1, keepdims=True)             # (B, S)
        c_i = jnp.sum(lstm * cv[:, :, None], axis=1)              # (B, d)

        c_ref[t] = c_i
        cv_ref[t] = cv
        c_prev = c_i


def controller_forward(params, lstm_seq, q_encoding, seq_length, gumbel_noise,
                       *, use_gumbel=False):
    S, B, d = lstm_seq.shape
    T = params["wq"].shape[0]
    M = params["w2"].shape[1]

    # Layout plumbing (done once in the wrapper, outside the kernel):
    #   * batch-major sequence so (sublane, lane) axes are (S, d)
    #   * per-step fc_q_t weights/biases flattened so all T q_i's come from
    #     a single (B, d) @ (d, T*d) matmul in the kernel prologue.
    lstm_bsd = jnp.transpose(lstm_seq, (1, 0, 2))                        # (B, S, d)
    wq_flat = jnp.transpose(params["wq"], (1, 0, 2)).reshape(d, T * d)   # (d, T*d)
    bq_flat = params["bq"].reshape(1, T * d)                             # (1, T*d)
    seqlen = seq_length.reshape(B, 1).astype(jnp.int32)

    kernel = functools.partial(_controller_kernel, T=T, d=d, use_gumbel=use_gumbel)
    vmem = pl.BlockSpec(memory_space=pltpu.MemorySpace.VMEM)

    out_shape = (
        jax.ShapeDtypeStruct((T, B, M), jnp.float32),   # module_logit
        jax.ShapeDtypeStruct((T, B, M), jnp.float32),   # module_prob
        jax.ShapeDtypeStruct((T, B, d), jnp.float32),   # c
        jax.ShapeDtypeStruct((T, B, S), jnp.float32),   # cv (already (T, B, S))
    )

    return pl.pallas_call(
        kernel,
        out_shape=out_shape,
        in_specs=[vmem] * 16,
        out_specs=(vmem, vmem, vmem, vmem),
    )(
        q_encoding,
        lstm_bsd,
        seqlen,
        gumbel_noise,
        params["c_init"],
        wq_flat, bq_flat,
        params["wqc_q"], params["wqc_c"], params["bqc"],
        params["w1"], params["b1"],
        params["w2"], params["b2"],
        params["wcv"], params["bcv"],
    )


def controller_ref(params, lstm_seq, q_encoding, seq_length, gumbel_noise,
                   *, use_gumbel=False):
    """Pure-JAX reference mirroring the PyTorch forward."""
    S, B, d = lstm_seq.shape
    T = params["wq"].shape[0]
    c_prev = jnp.broadcast_to(params["c_init"], (B, d))
    logits, probs, cs, cvs = [], [], [], []
    for t in range(T):
        q_i = q_encoding @ params["wq"][t] + params["bq"][t, 0]
        cq_i = q_i @ params["wqc_q"] + c_prev @ params["wqc_c"] + params["bqc"][0]
        h = jnp.maximum(cq_i @ params["w1"] + params["b1"][0], 0.0)
        logit = h @ params["w2"] + params["b2"][0]
        soft = jax.nn.softmax(logit + gumbel_noise[t], axis=-1)
        prob = (jax.nn.one_hot(jnp.argmax(soft, -1), soft.shape[-1])
                if use_gumbel else soft)
        elem = cq_i[None] * lstm_seq
        raw = jnp.sum(elem * params["wcv"][0][None, None, :], axis=-1) + params["bcv"][0, 0]
        invalid = jnp.arange(S)[:, None] >= seq_length[None, :]
        raw = jnp.where(invalid, -jnp.inf, raw)
        cv = jax.nn.softmax(raw, axis=0)
        c_i = jnp.sum(lstm_seq * cv[:, :, None], axis=0)
        c_prev = c_i
        logits.append(logit); probs.append(prob); cs.append(c_i); cvs.append(cv.T)
    return (jnp.stack(logits), jnp.stack(probs), jnp.stack(cs), jnp.stack(cvs))


if __name__ == "__main__":
    T, B, S, d, M = 3, 2, 8, 32, 4   # max_step, batch, seq_max_len, lstm_dim, num_modules
    USE_GUMBEL = False

    key = jax.random.PRNGKey(0)
    ks = jax.random.split(key, 16)
    s_d = 1.0 / np.sqrt(d)
    s_2d = 1.0 / np.sqrt(2 * d)

    params = {
        "c_init": jax.random.normal(ks[0], (1, d), jnp.float32) * s_d,
        "wq":     jax.random.normal(ks[1], (T, d, d), jnp.float32) * s_d,
        "bq":     jax.random.normal(ks[2], (T, 1, d), jnp.float32) * s_d,
        "wqc_q":  jax.random.normal(ks[3], (d, d), jnp.float32) * s_2d,
        "wqc_c":  jax.random.normal(ks[4], (d, d), jnp.float32) * s_2d,
        "bqc":    jax.random.normal(ks[5], (1, d), jnp.float32) * s_2d,
        "w1":     jax.random.normal(ks[6], (d, d), jnp.float32) * s_d,
        "b1":     jax.random.normal(ks[7], (1, d), jnp.float32) * s_d,
        "w2":     jax.random.normal(ks[8], (d, M), jnp.float32) * s_d,
        "b2":     jax.random.normal(ks[9], (1, M), jnp.float32) * s_d,
        "wcv":    jax.random.normal(ks[10], (1, d), jnp.float32) * s_d,
        "bcv":    jax.random.normal(ks[11], (1, 1), jnp.float32) * s_d,
    }

    lstm_seq = jax.random.normal(ks[12], (S, B, d), jnp.float32)
    q_encoding = jax.random.normal(ks[13], (B, d), jnp.float32)
    embed_seq = jax.random.normal(ks[14], (S, B, d), jnp.float32)  # unused by forward (as in PyTorch)
    seq_length = jnp.array([S, 5], dtype=jnp.int32)
    # gumbel_softmax noise sampled once in the wrapper (stochastic op); same noise fed to ref.
    gumbel_noise = jax.random.gumbel(ks[15], (T, B, M), jnp.float32)

    outs = controller_forward(params, lstm_seq, q_encoding, seq_length,
                              gumbel_noise, use_gumbel=USE_GUMBEL)
    outs = jax.block_until_ready(outs)

    refs = controller_ref(params, lstm_seq, q_encoding, seq_length,
                          gumbel_noise, use_gumbel=USE_GUMBEL)
    for o, r in zip(outs, refs):
        np.testing.assert_allclose(np.asarray(o), np.asarray(r), rtol=1e-5, atol=1e-5)

    print("KERNEL_OK")
</pallas_src>

<mosaic_0001>
module attributes {stable_mosaic.version = 11 : i64} {
  func.func @_controller_kernel(%arg0: memref<2x32xf32, #tpu.memory_space<vmem>>, %arg1: memref<2x8x32xf32, #tpu.memory_space<vmem>>, %arg2: memref<2x1xi32, #tpu.memory_space<vmem>>, %arg3: memref<3x2x4xf32, #tpu.memory_space<vmem>>, %arg4: memref<1x32xf32, #tpu.memory_space<vmem>>, %arg5: memref<32x96xf32, #tpu.memory_space<vmem>>, %arg6: memref<1x96xf32, #tpu.memory_space<vmem>>, %arg7: memref<32x32xf32, #tpu.memory_space<vmem>>, %arg8: memref<32x32xf32, #tpu.memory_space<vmem>>, %arg9: memref<1x32xf32, #tpu.memory_space<vmem>>, %arg10: memref<32x32xf32, #tpu.memory_space<vmem>>, %arg11: memref<1x32xf32, #tpu.memory_space<vmem>>, %arg12: memref<32x4xf32, #tpu.memory_space<vmem>>, %arg13: memref<1x4xf32, #tpu.memory_space<vmem>>, %arg14: memref<1x32xf32, #tpu.memory_space<vmem>>, %arg15: memref<1x1xf32, #tpu.memory_space<vmem>>, %arg16: memref<3x2x4xf32, #tpu.memory_space<vmem>>, %arg17: memref<3x2x4xf32, #tpu.memory_space<vmem>>, %arg18: memref<3x2x32xf32, #tpu.memory_space<vmem>>, %arg19: memref<3x2x8xf32, #tpu.memory_space<vmem>>) attributes {dimension_semantics = [], scalar_prefetch = 0 : i64, scratch_operands = 0 : i64, tpu.core_type = #tpu.core_type<tc>} {
    %c0 = arith.constant 0 : index
    %c0_0 = arith.constant 0 : index
    %0 = vector.load %arg0[%c0, %c0_0] : memref<2x32xf32, #tpu.memory_space<vmem>>, vector<2x32xf32>
    %c0_1 = arith.constant 0 : index
    %c0_2 = arith.constant 0 : index
    %c0_3 = arith.constant 0 : index
    %1 = vector.load %arg1[%c0_1, %c0_2, %c0_3] : memref<2x8x32xf32, #tpu.memory_space<vmem>>, vector<2x8x32xf32>
    %c0_4 = arith.constant 0 : index
    %c0_5 = arith.constant 0 : index
    %2 = vector.load %arg5[%c0_4, %c0_5] : memref<32x96xf32, #tpu.memory_space<vmem>>, vector<32x96xf32>
    %cst = arith.constant dense<0.000000e+00> : vector<2x96xf32>
    %3 = tpu.matmul %0, %2, %cst {dimension_numbers = #tpu.dot_dimension_numbers<[1], [0], [0], [1], [0, 0, 1, 1], [], []>} : vector<2x32xf32>, vector<32x96xf32>, vector<2x96xf32> -> vector<2x96xf32>
    %c0_6 = arith.constant 0 : index
    %c0_7 = arith.constant 0 : index
    %4 = vector.load %arg6[%c0_6, %c0_7] : memref<1x96xf32, #tpu.memory_space<vmem>>, vector<1x96xf32>
    %5 = vector.broadcast %4 : vector<1x96xf32> to vector<2x96xf32>
    %6 = arith.addf %3, %5 : vector<2x96xf32>
    %7 = tpu.iota {dimensions = array<i32: 1>} : vector<2x8xi32>
    %c0_8 = arith.constant 0 : index
    %c0_9 = arith.constant 0 : index
    %8 = vector.load %arg2[%c0_8, %c0_9] : memref<2x1xi32, #tpu.memory_space<vmem>>, vector<2x1xi32>
    %9 = vector.broadcast %8 : vector<2x1xi32> to vector<2x8xi32>
    %10 = arith.cmpi slt, %7, %9 : vector<2x8xi32>
    %c0_10 = arith.constant 0 : index
    %c0_11 = arith.constant 0 : index
    %11 = vector.load %arg14[%c0_10, %c0_11] : memref<1x32xf32, #tpu.memory_space<vmem>>, vector<1x32xf32>
    %c0_12 = arith.constant 0 : index
    %c0_13 = arith.constant 0 : index
    %12 = vector.load %arg15[%c0_12, %c0_13] : memref<1x1xf32, #tpu.memory_space<vmem>>, vector<1x1xf32>
    %c0_14 = arith.constant 0 : index
    %c0_15 = arith.constant 0 : index
    %13 = vector.load %arg7[%c0_14, %c0_15] : memref<32x32xf32, #tpu.memory_space<vmem>>, vector<32x32xf32>
    %c0_16 = arith.constant 0 : index
    %c0_17 = arith.constant 0 : index
    %14 = vector.load %arg8[%c0_16, %c0_17] : memref<32x32xf32, #tpu.memory_space<vmem>>, vector<32x32xf32>
    %c0_18 = arith.constant 0 : index
    %c0_19 = arith.constant 0 : index
    %15 = vector.load %arg9[%c0_18, %c0_19] : memref<1x32xf32, #tpu.memory_space<vmem>>, vector<1x32xf32>
    %c0_20 = arith.constant 0 : index
    %c0_21 = arith.constant 0 : index
    %16 = vector.load %arg10[%c0_20, %c0_21] : memref<32x32xf32, #tpu.memory_space<vmem>>, vector<32x32xf32>
    %c0_22 = arith.constant 0 : index
    %c0_23 = arith.constant 0 : index
    %17 = vector.load %arg11[%c0_22, %c0_23] : memref<1x32xf32, #tpu.memory_space<vmem>>, vector<1x32xf32>
    %c0_24 = arith.constant 0 : index
    %c0_25 = arith.constant 0 : index
    %18 = vector.load %arg12[%c0_24, %c0_25] : memref<32x4xf32, #tpu.memory_space<vmem>>, vector<32x4xf32>
    %c0_26 = arith.constant 0 : index
    %c0_27 = arith.constant 0 : index
    %19 = vector.load %arg13[%c0_26, %c0_27] : memref<1x4xf32, #tpu.memory_space<vmem>>, vector<1x4xf32>
    %c0_28 = arith.constant 0 : index
    %c0_29 = arith.constant 0 : index
    %20 = vector.load %arg4[%c0_28, %c0_29] : memref<1x32xf32, #tpu.memory_space<vmem>>, vector<1x32xf32>
    %21 = vector.shape_cast %20 : vector<1x32xf32> to vector<1x32xf32>
    %22 = vector.broadcast %21 : vector<1x32xf32> to vector<2x32xf32>
    %23 = vector.extract_strided_slice %6 {offsets = [0, 0], sizes = [2, 32], strides = [1, 1]} : vector<2x96xf32> to vector<2x32xf32>
    %cst_30 = arith.constant dense<0.000000e+00> : vector<2x32xf32>
    %24 = tpu.matmul %23, %13, %cst_30 {dimension_numbers = #tpu.dot_dimension_numbers<[1], [0], [0], [1], [0, 0, 1, 1], [], []>} : vector<2x32xf32>, vector<32x32xf32>, vector<2x32xf32> -> vector<2x32xf32>
    %cst_31 = arith.constant dense<0.000000e+00> : vector<2x32xf32>
    %25 = tpu.matmul %22, %14, %cst_31 {dimension_numbers = #tpu.dot_dimension_numbers<[1], [0], [0], [1], [0, 0, 1, 1], [], []>} : vector<2x32xf32>, vector<32x32xf32>, vector<2x32xf32> -> vector<2x32xf32>
    %26 = arith.addf %24, %25 : vector<2x32xf32>
    %27 = vector.broadcast %15 : vector<1x32xf32> to vector<2x32xf32>
    %28 = arith.addf %26, %27 : vector<2x32xf32>
    %cst_32 = arith.constant dense<0.000000e+00> : vector<2x32xf32>
    %29 = tpu.matmul %28, %16, %cst_32 {dimension_numbers = #tpu.dot_dimension_numbers<[1], [0], [0], [1], [0, 0, 1, 1], [], []>} : vector<2x32xf32>, vector<32x32xf32>, vector<2x32xf32> -> vector<2x32xf32>
    %30 = vector.broadcast %17 : vector<1x32xf32> to vector<2x32xf32>
    %31 = arith.addf %29, %30 : vector<2x32xf32>
    %cst_33 = arith.constant 0.000000e+00 : f32
    %32 = vector.broadcast %cst_33 : f32 to vector<2x32xf32>
    %33 = arith.maximumf %31, %32 : vector<2x32xf32>
    %cst_34 = arith.constant dense<0.000000e+00> : vector<2x4xf32>
    %34 = tpu.matmul %33, %18, %cst_34 {dimension_numbers = #tpu.dot_dimension_numbers<[1], [0], [0], [1], [0, 0, 1, 1], [], []>} : vector<2x32xf32>, vector<32x4xf32>, vector<2x4xf32> -> vector<2x4xf32>
    %35 = vector.broadcast %19 : vector<1x4xf32> to vector<2x4xf32>
    %36 = arith.addf %34, %35 : vector<2x4xf32>
    %c0_35 = arith.constant 0 : index
    %c0_36 = arith.constant 0 : index
    %c0_37 = arith.constant 0 : index
    %37 = vector.load %arg16[%c0_35, %c0_36, %c0_37] : memref<3x2x4xf32, #tpu.memory_space<vmem>>, vector<1x2x4xf32>
    %38 = vector.shape_cast %37 : vector<1x2x4xf32> to vector<2x4xf32>
    %39 = vector.shape_cast %36 : vector<2x4xf32> to vector<1x2x4xf32>
    tpu.vector_store %arg16[%c0_35, %c0_36, %c0_37], %39 {strides = array<i32>} : memref<3x2x4xf32, #tpu.memory_space<vmem>>, vector<1x2x4xf32>,
    %c0_38 = arith.constant 0 : index
    %c0_39 = arith.constant 0 : index
    %c0_40 = arith.constant 0 : index
    %40 = vector.load %arg3[%c0_38, %c0_39, %c0_40] : memref<3x2x4xf32, #tpu.memory_space<vmem>>, vector<1x2x4xf32>
    %41 = vector.shape_cast %40 : vector<1x2x4xf32> to vector<2x4xf32>
    %42 = arith.addf %36, %41 : vector<2x4xf32>
    %cst_41 = arith.constant dense<0xFF800000> : vector<2xf32>
    %43 = vector.multi_reduction <maximumf>, %42, %cst_41 [1] : vector<2x4xf32> to vector<2xf32>
    %44 = vector.shape_cast %43 : vector<2xf32> to vector<2x1xf32>
    %45 = vector.broadcast %44 : vector<2x1xf32> to vector<2x4xf32>
    %46 = arith.subf %42, %45 : vector<2x4xf32>
    %47 = math.exp %46 : vector<2x4xf32>
    %cst_42 = arith.constant dense<0.000000e+00> : vector<2xf32>
    %48 = vector.multi_reduction <add>, %47, %cst_42 [1] : vector<2x4xf32> to vector<2xf32>
    %49 = vector.shape_cast %48 : vector<2xf32> to vector<2x1xf32>
    %50 = vector.broadcast %49 : vector<2x1xf32> to vector<2x4xf32>
    %51 = arith.divf %47, %50 : vector<2x4xf32>
    %c0_43 = arith.constant 0 : index
    %c0_44 = arith.constant 0 : index
    %c0_45 = arith.constant 0 : index
    %52 = vector.load %arg17[%c0_43, %c0_44, %c0_45] : memref<3x2x4xf32, #tpu.memory_space<vmem>>, vector<1x2x4xf32>
    %53 = vector.shape_cast %52 : vector<1x2x4xf32> to vector<2x4xf32>
    %54 = vector.shape_cast %51 : vector<2x4xf32> to vector<1x2x4xf32>
    tpu.vector_store %arg17[%c0_43, %c0_44, %c0_45], %54 {strides = array<i32>} : memref<3x2x4xf32, #tpu.memory_space<vmem>>, vector<1x2x4xf32>,
    %55 = vector.broadcast %11 : vector<1x32xf32> to vector<2x32xf32>
    %56 = arith.mulf %28, %55 : vector<2x32xf32>
    %57 = vector.shape_cast %56 : vector<2x32xf32> to vector<2x1x32xf32>
    %58 = vector.broadcast %57 : vector<2x1x32xf32> to vector<2x8x32xf32>
    %59 = arith.mulf %1, %58 : vector<2x8x32xf32>
    %cst_46 = arith.constant dense<0.000000e+00> : vector<2x8xf32>
    %60 = vector.multi_reduction <add>, %59, %cst_46 [2] : vector<2x8x32xf32> to vector<2x8xf32>
    %61 = vector.broadcast %12 : vector<1x1xf32> to vector<2x8xf32>
    %62 = arith.addf %60, %61 : vector<2x8xf32>
    %cst_47 = arith.constant -1.000000e+30 : f32
    %63 = vector.broadcast %cst_47 : f32 to vector<2x8xf32>
    %64 = arith.select %10, %62, %63 : vector<2x8xi1>, vector<2x8xf32>
    %cst_48 = arith.constant dense<0xFF800000> : vector<2xf32>
    %65 = vector.multi_reduction <maximumf>, %64, %cst_48 [1] : vector<2x8xf32> to vector<2xf32>
    %66 = vector.shape_cast %65 : vector<2xf32> to vector<2x1xf32>
    %67 = vector.broadcast %66 : vector<2x1xf32> to vector<2x8xf32>
    %68 = arith.subf %64, %67 : vector<2x8xf32>
    %69 = math.exp %68 : vector<2x8xf32>
    %cst_49 = arith.constant dense<0.000000e+00> : vector<2xf32>
    %70 = vector.multi_reduction <add>, %69, %cst_49 [1] : vector<2x8xf32> to vector<2xf32>
    %71 = vector.shape_cast %70 : vector<2xf32> to vector<2x1xf32>
    %72 = vector.broadcast %71 : vector<2x1xf32> to vector<2x8xf32>
    %73 = arith.divf %69, %72 : vector<2x8xf32>
    %74 = vector.shape_cast %73 : vector<2x8xf32> to vector<2x8x1xf32>
    %75 = vector.broadcast %74 : vector<2x8x1xf32> to vector<2x8x32xf32>
    %76 = arith.mulf %1, %75 : vector<2x8x32xf32>
    %cst_50 = arith.constant dense<0.000000e+00> : vector<2x32xf32>
    %77 = vector.multi_reduction <add>, %76, %cst_50 [1] : vector<2x8x32xf32> to vector<2x32xf32>
    %c0_51 = arith.constant 0 : index
    %c0_52 = arith.constant 0 : index
    %c0_53 = arith.constant 0 : index
    %78 = vector.load %arg18[%c0_51, %c0_52, %c0_53] : memref<3x2x32xf32, #tpu.memory_space<vmem>>, vector<1x2x32xf32>
    %79 = vector.shape_cast %78 : vector<1x2x32xf32> to vector<2x32xf32>
    %80 = vector.shape_cast %77 : vector<2x32xf32> to vector<1x2x32xf32>
    tpu.vector_store %arg18[%c0_51, %c0_52, %c0_53], %80 {strides = array<i32>} : memref<3x2x32xf32, #tpu.memory_space<vmem>>, vector<1x2x32xf32>,
    %c0_54 = arith.constant 0 : index
    %c0_55 = arith.constant 0 : index
    %c0_56 = arith.constant 0 : index
    %81 = vector.load %arg19[%c0_54, %c0_55, %c0_56] : memref<3x2x8xf32, #tpu.memory_space<vmem>>, vector<1x2x8xf32>
    %82 = vector.shape_cast %81 : vector<1x2x8xf32> to vector<2x8xf32>
    %83 = vector.shape_cast %73 : vector<2x8xf32> to vector<1x2x8xf32>
    tpu.vector_store %arg19[%c0_54, %c0_55, %c0_56], %83 {strides = array<i32>} : memref<3x2x8xf32, #tpu.memory_space<vmem>>, vector<1x2x8xf32>,
    %84 = vector.extract_strided_slice %6 {offsets = [0, 32], sizes = [2, 32], strides = [1, 1]} : vector<2x96xf32> to vector<2x32xf32>
    %cst_57 = arith.constant dense<0.000000e+00> : vector<2x32xf32>
    %85 = tpu.matmul %84, %13, %cst_57 {dimension_numbers = #tpu.dot_dimension_numbers<[1], [0], [0], [1], [0, 0, 1, 1], [], []>} : vector<2x32xf32>, vector<32x32xf32>, vector<2x32xf32> -> vector<2x32xf32>
    %cst_58 = arith.constant dense<0.000000e+00> : vector<2x32xf32>
    %86 = tpu.matmul %77, %14, %cst_58 {dimension_numbers = #tpu.dot_dimension_numbers<[1], [0], [0], [1], [0, 0, 1, 1], [], []>} : vector<2x32xf32>, vector<32x32xf32>, vector<2x32xf32> -> vector<2x32xf32>
    %87 = arith.addf %85, %86 : vector<2x32xf32>
    %88 = vector.broadcast %15 : vector<1x32xf32> to vector<2x32xf32>
    %89 = arith.addf %87, %88 : vector<2x32xf32>
    %cst_59 = arith.constant dense<0.000000e+00> : vector<2x32xf32>
    %90 = tpu.matmul %89, %16, %cst_59 {dimension_numbers = #tpu.dot_dimension_numbers<[1], [0], [0], [1], [0, 0, 1, 1], [], []>} : vector<2x32xf32>, vector<32x32xf32>, vector<2x32xf32> -> vector<2x32xf32>
    %91 = vector.broadcast %17 : vector<1x32xf32> to vector<2x32xf32>
    %92 = arith.addf %90, %91 : vector<2x32xf32>
    %cst_60 = arith.constant 0.000000e+00 : f32
    %93 = vector.broadcast %cst_60 : f32 to vector<2x32xf32>
    %94 = arith.maximumf %92, %93 : vector<2x32xf32>
    %cst_61 = arith.constant dense<0.000000e+00> : vector<2x4xf32>
    %95 = tpu.matmul %94, %18, %cst_61 {dimension_numbers = #tpu.dot_dimension_numbers<[1], [0], [0], [1], [0, 0, 1, 1], [], []>} : vector<2x32xf32>, vector<32x4xf32>, vector<2x4xf32> -> vector<2x4xf32>
    %96 = vector.broadcast %19 : vector<1x4xf32> to vector<2x4xf32>
    %97 = arith.addf %95, %96 : vector<2x4xf32>
    %c1 = arith.constant 1 : index
    %c0_62 = arith.constant 0 : index
    %c0_63 = arith.constant 0 : index
    %98 = vector.load %arg16[%c1, %c0_62, %c0_63] : memref<3x2x4xf32, #tpu.memory_space<vmem>>, vector<1x2x4xf32>
    %99 = vector.shape_cast %98 : vector<1x2x4xf32> to vector<2x4xf32>
    %100 = vector.shape_cast %97 : vector<2x4xf32> to vector<1x2x4xf32>
    tpu.vector_store %arg16[%c1, %c0_62, %c0_63], %100 {strides = array<i32>} : memref<3x2x4xf32, #tpu.memory_space<vmem>>, vector<1x2x4xf32>,
    %c1_64 = arith.constant 1 : index
    %c0_65 = arith.constant 0 : index
    %c0_66 = arith.constant 0 : index
    %101 = vector.load %arg3[%c1_64, %c0_65, %c0_66] : memref<3x2x4xf32, #tpu.memory_space<vmem>>, vector<1x2x4xf32>
    %102 = vector.shape_cast %101 : vector<1x2x4xf32> to vector<2x4xf32>
    %103 = arith.addf %97, %102 : vector<2x4xf32>
    %cst_67 = arith.constant dense<0xFF800000> : vector<2xf32>
    %104 = vector.multi_reduction <maximumf>, %103, %cst_67 [1] : vector<2x4xf32> to vector<2xf32>
    %105 = vector.shape_cast %104 : vector<2xf32> to vector<2x1xf32>
    %106 = vector.broadcast %105 : vector<2x1xf32> to vector<2x4xf32>
    %107 = arith.subf %103, %106 : vector<2x4xf32>
    %108 = math.exp %107 : vector<2x4xf32>
    %cst_68 = arith.constant dense<0.000000e+00> : vector<2xf32>
    %109 = vector.multi_reduction <add>, %108, %cst_68 [1] : vector<2x4xf32> to vector<2xf32>
    %110 = vector.shape_cast %109 : vector<2xf32> to vector<2x1xf32>
    %111 = vector.broadcast %110 : vector<2x1xf32> to vector<2x4xf32>
    %112 = arith.divf %108, %111 : vector<2x4xf32>
    %c1_69 = arith.constant 1 : index
    %c0_70 = arith.constant 0 : index
    %c0_71 = arith.constant 0 : index
    %113 = vector.load %arg17[%c1_69, %c0_70, %c0_71] : memref<3x2x4xf32, #tpu.memory_space<vmem>>, vector<1x2x4xf32>
    %114 = vector.shape_cast %113 : vector<1x2x4xf32> to vector<2x4xf32>
    %115 = vector.shape_cast %112 : vector<2x4xf32> to vector<1x2x4xf32>
    tpu.vector_store %arg17[%c1_69, %c0_70, %c0_71], %115 {strides = array<i32>} : memref<3x2x4xf32, #tpu.memory_space<vmem>>, vector<1x2x4xf32>,
    %116 = vector.broadcast %11 : vector<1x32xf32> to vector<2x32xf32>
    %117 = arith.mulf %89, %116 : vector<2x32xf32>
    %118 = vector.shape_cast %117 : vector<2x32xf32> to vector<2x1x32xf32>
    %119 = vector.broadcast %118 : vector<2x1x32xf32> to vector<2x8x32xf32>
    %120 = arith.mulf %1, %119 : vector<2x8x32xf32>
    %cst_72 = arith.constant dense<0.000000e+00> : vector<2x8xf32>
    %121 = vector.multi_reduction <add>, %120, %cst_72 [2] : vector<2x8x32xf32> to vector<2x8xf32>
    %122 = vector.broadcast %12 : vector<1x1xf32> to vector<2x8xf32>
    %123 = arith.addf %121, %122 : vector<2x8xf32>
    %cst_73 = arith.constant -1.000000e+30 : f32
    %124 = vector.broadcast %cst_73 : f32 to vector<2x8xf32>
    %125 = arith.select %10, %123, %124 : vector<2x8xi1>, vector<2x8xf32>
    %cst_74 = arith.constant dense<0xFF800000> : vector<2xf32>
    %126 = vector.multi_reduction <maximumf>, %125, %cst_74 [1] : vector<2x8xf32> to vector<2xf32>
    %127 = vector.shape_cast %126 : vector<2xf32> to vector<2x1xf32>
    %128 = vector.broadcast %127 : vector<2x1xf32> to vector<2x8xf32>
    %129 = arith.subf %125, %128 : vector<2x8xf32>
    %130 = math.exp %129 : vector<2x8xf32>
    %cst_75 = arith.constant dense<0.000000e+00> : vector<2xf32>
    %131 = vector.multi_reduction <add>, %130, %cst_75 [1] : vector<2x8xf32> to vector<2xf32>
    %132 = vector.shape_cast %131 : vector<2xf32> to vector<2x1xf32>
    %133 = vector.broadcast %132 : vector<2x1xf32> to vector<2x8xf32>
    %134 = arith.divf %130, %133 : vector<2x8xf32>
    %135 = vector.shape_cast %134 : vector<2x8xf32> to vector<2x8x1xf32>
    %136 = vector.broadcast %135 : vector<2x8x1xf32> to vector<2x8x32xf32>
    %137 = arith.mulf %1, %136 : vector<2x8x32xf32>
    %cst_76 = arith.constant dense<0.000000e+00> : vector<2x32xf32>
    %138 = vector.multi_reduction <add>, %137, %cst_76 [1] : vector<2x8x32xf32> to vector<2x32xf32>
    %c1_77 = arith.constant 1 : index
    %c0_78 = arith.constant 0 : index
    %c0_79 = arith.constant 0 : index
    %139 = vector.load %arg18[%c1_77, %c0_78, %c0_79] : memref<3x2x32xf32, #tpu.memory_space<vmem>>, vector<1x2x32xf32>
    %140 = vector.shape_cast %139 : vector<1x2x32xf32> to vector<2x32xf32>
    %141 = vector.shape_cast %138 : vector<2x32xf32> to vector<1x2x32xf32>
    tpu.vector_store %arg18[%c1_77, %c0_78, %c0_79], %141 {strides = array<i32>} : memref<3x2x32xf32, #tpu.memory_space<vmem>>, vector<1x2x32xf32>,
    %c1_80 = arith.constant 1 : index
    %c0_81 = arith.constant 0 : index
    %c0_82 = arith.constant 0 : index
    %142 = vector.load %arg19[%c1_80, %c0_81, %c0_82] : memref<3x2x8xf32, #tpu.memory_space<vmem>>, vector<1x2x8xf32>
    %143 = vector.shape_cast %142 : vector<1x2x8xf32> to vector<2x8xf32>
    %144 = vector.shape_cast %134 : vector<2x8xf32> to vector<1x2x8xf32>
    tpu.vector_store %arg19[%c1_80, %c0_81, %c0_82], %144 {strides = array<i32>} : memref<3x2x8xf32, #tpu.memory_space<vmem>>, vector<1x2x8xf32>,
    %145 = vector.extract_strided_slice %6 {offsets = [0, 64], sizes = [2, 32], strides = [1, 1]} : vector<2x96xf32> to vector<2x32xf32>
    %cst_83 = arith.constant dense<0.000000e+00> : vector<2x32xf32>
    %146 = tpu.matmul %145, %13, %cst_83 {dimension_numbers = #tpu.dot_dimension_numbers<[1], [0], [0], [1], [0, 0, 1, 1], [], []>} : vector<2x32xf32>, vector<32x32xf32>, vector<2x32xf32> -> vector<2x32xf32>
    %cst_84 = arith.constant dense<0.000000e+00> : vector<2x32xf32>
    %147 = tpu.matmul %138, %14, %cst_84 {dimension_numbers = #tpu.dot_dimension_numbers<[1], [0], [0], [1], [0, 0, 1, 1], [], []>} : vector<2x32xf32>, vector<32x32xf32>, vector<2x32xf32> -> vector<2x32xf32>
    %148 = arith.addf %146, %147 : vector<2x32xf32>
    %149 = vector.broadcast %15 : vector<1x32xf32> to vector<2x32xf32>
    %150 = arith.addf %148, %149 : vector<2x32xf32>
    %cst_85 = arith.constant dense<0.000000e+00> : vector<2x32xf32>
    %151 = tpu.matmul %150, %16, %cst_85 {dimension_numbers = #tpu.dot_dimension_numbers<[1], [0], [0], [1], [0, 0, 1, 1], [], []>} : vector<2x32xf32>, vector<32x32xf32>, vector<2x32xf32> -> vector<2x32xf32>
    %152 = vector.broadcast %17 : vector<1x32xf32> to vector<2x32xf32>
    %153 = arith.addf %151, %152 : vector<2x32xf32>
    %cst_86 = arith.constant 0.000000e+00 : f32
    %154 = vector.broadcast %cst_86 : f32 to vector<2x32xf32>
    %155 = arith.maximumf %153, %154 : vector<2x32xf32>
    %cst_87 = arith.constant dense<0.000000e+00> : vector<2x4xf32>
    %156 = tpu.matmul %155, %18, %cst_87 {dimension_numbers = #tpu.dot_dimension_numbers<[1], [0], [0], [1], [0, 0, 1, 1], [], []>} : vector<2x32xf32>, vector<32x4xf32>, vector<2x4xf32> -> vector<2x4xf32>
    %157 = vector.broadcast %19 : vector<1x4xf32> to vector<2x4xf32>
    %158 = arith.addf %156, %157 : vector<2x4xf32>
    %c2 = arith.constant 2 : index
    %c0_88 = arith.constant 0 : index
    %c0_89 = arith.constant 0 : index
    %159 = vector.load %arg16[%c2, %c0_88, %c0_89] : memref<3x2x4xf32, #tpu.memory_space<vmem>>, vector<1x2x4xf32>
    %160 = vector.shape_cast %159 : vector<1x2x4xf32> to vector<2x4xf32>
    %161 = vector.shape_cast %158 : vector<2x4xf32> to vector<1x2x4xf32>
    tpu.vector_store %arg16[%c2, %c0_88, %c0_89], %161 {strides = array<i32>} : memref<3x2x4xf32, #tpu.memory_space<vmem>>, vector<1x2x4xf32>,
    %c2_90 = arith.constant 2 : index
    %c0_91 = arith.constant 0 : index
    %c0_92 = arith.constant 0 : index
    %162 = vector.load %arg3[%c2_90, %c0_91, %c0_92] : memref<3x2x4xf32, #tpu.memory_space<vmem>>, vector<1x2x4xf32>
    %163 = vector.shape_cast %162 : vector<1x2x4xf32> to vector<2x4xf32>
    %164 = arith.addf %158, %163 : vector<2x4xf32>
    %cst_93 = arith.constant dense<0xFF800000> : vector<2xf32>
    %165 = vector.multi_reduction <maximumf>, %164, %cst_93 [1] : vector<2x4xf32> to vector<2xf32>
    %166 = vector.shape_cast %165 : vector<2xf32> to vector<2x1xf32>
    %167 = vector.broadcast %166 : vector<2x1xf32> to vector<2x4xf32>
    %168 = arith.subf %164, %167 : vector<2x4xf32>
    %169 = math.exp %168 : vector<2x4xf32>
    %cst_94 = arith.constant dense<0.000000e+00> : vector<2xf32>
    %170 = vector.multi_reduction <add>, %169, %cst_94 [1] : vector<2x4xf32> to vector<2xf32>
    %171 = vector.shape_cast %170 : vector<2xf32> to vector<2x1xf32>
    %172 = vector.broadcast %171 : vector<2x1xf32> to vector<2x4xf32>
    %173 = arith.divf %169, %172 : vector<2x4xf32>
    %c2_95 = arith.constant 2 : index
    %c0_96 = arith.constant 0 : index
    %c0_97 = arith.constant 0 : index
    %174 = vector.load %arg17[%c2_95, %c0_96, %c0_97] : memref<3x2x4xf32, #tpu.memory_space<vmem>>, vector<1x2x4xf32>
    %175 = vector.shape_cast %174 : vector<1x2x4xf32> to vector<2x4xf32>
    %176 = vector.shape_cast %173 : vector<2x4xf32> to vector<1x2x4xf32>
    tpu.vector_store %arg17[%c2_95, %c0_96, %c0_97], %176 {strides = array<i32>} : memref<3x2x4xf32, #tpu.memory_space<vmem>>, vector<1x2x4xf32>,
    %177 = vector.broadcast %11 : vector<1x32xf32> to vector<2x32xf32>
    %178 = arith.mulf %150, %177 : vector<2x32xf32>
    %179 = vector.shape_cast %178 : vector<2x32xf32> to vector<2x1x32xf32>
    %180 = vector.broadcast %179 : vector<2x1x32xf32> to vector<2x8x32xf32>
    %181 = arith.mulf %1, %180 : vector<2x8x32xf32>
    %cst_98 = arith.constant dense<0.000000e+00> : vector<2x8xf32>
    %182 = vector.multi_reduction <add>, %181, %cst_98 [2] : vector<2x8x32xf32> to vector<2x8xf32>
    %183 = vector.broadcast %12 : vector<1x1xf32> to vector<2x8xf32>
    %184 = arith.addf %182, %183 : vector<2x8xf32>
    %cst_99 = arith.constant -1.000000e+30 : f32
    %185 = vector.broadcast %cst_99 : f32 to vector<2x8xf32>
    %186 = arith.select %10, %184, %185 : vector<2x8xi1>, vector<2x8xf32>
    %cst_100 = arith.constant dense<0xFF800000> : vector<2xf32>
    %187 = vector.multi_reduction <maximumf>, %186, %cst_100 [1] : vector<2x8xf32> to vector<2xf32>
    %188 = vector.shape_cast %187 : vector<2xf32> to vector<2x1xf32>
    %189 = vector.broadcast %188 : vector<2x1xf32> to vector<2x8xf32>
    %190 = arith.subf %186, %189 : vector<2x8xf32>
    %191 = math.exp %190 : vector<2x8xf32>
    %cst_101 = arith.constant dense<0.000000e+00> : vector<2xf32>
    %192 = vector.multi_reduction <add>, %191, %cst_101 [1] : vector<2x8xf32> to vector<2xf32>
    %193 = vector.shape_cast %192 : vector<2xf32> to vector<2x1xf32>
    %194 = vector.broadcast %193 : vector<2x1xf32> to vector<2x8xf32>
    %195 = arith.divf %191, %194 : vector<2x8xf32>
    %196 = vector.shape_cast %195 : vector<2x8xf32> to vector<2x8x1xf32>
    %197 = vector.broadcast %196 : vector<2x8x1xf32> to vector<2x8x32xf32>
    %198 = arith.mulf %1, %197 : vector<2x8x32xf32>
    %cst_102 = arith.constant dense<0.000000e+00> : vector<2x32xf32>
    %199 = vector.multi_reduction <add>, %198, %cst_102 [1] : vector<2x8x32xf32> to vector<2x32xf32>
    %c2_103 = arith.constant 2 : index
    %c0_104 = arith.constant 0 : index
    %c0_105 = arith.constant 0 : index
    %200 = vector.load %arg18[%c2_103, %c0_104, %c0_105] : memref<3x2x32xf32, #tpu.memory_space<vmem>>, vector<1x2x32xf32>
    %201 = vector.shape_cast %200 : vector<1x2x32xf32> to vector<2x32xf32>
    %202 = vector.shape_cast %199 : vector<2x32xf32> to vector<1x2x32xf32>
    tpu.vector_store %arg18[%c2_103, %c0_104, %c0_105], %202 {strides = array<i32>} : memref<3x2x32xf32, #tpu.memory_space<vmem>>, vector<1x2x32xf32>,
    %c2_106 = arith.constant 2 : index
    %c0_107 = arith.constant 0 : index
    %c0_108 = arith.constant 0 : index
    %203 = vector.load %arg19[%c2_106, %c0_107, %c0_108] : memref<3x2x8xf32, #tpu.memory_space<vmem>>, vector<1x2x8xf32>
    %204 = vector.shape_cast %203 : vector<1x2x8xf32> to vector<2x8xf32>
    %205 = vector.shape_cast %195 : vector<2x8xf32> to vector<1x2x8xf32>
    tpu.vector_store %arg19[%c2_106, %c0_107, %c0_108], %205 {strides = array<i32>} : memref<3x2x8xf32, #tpu.memory_space<vmem>>, vector<1x2x8xf32>,
    return
  }
}

</mosaic_0001>

<llo_original>
// kernel: tpu_custom_call.1
$region0: #{tpu_custom_call.1}
  #allocation0 [shape = 'u32[]', space=smem, size = 0x4, offset = 0x4, fixed_abs, tag = 'smem constant byte address 0x4 - core index']
  #allocation1 [shape = 'u32[144,128]{1,0:T(1,128)}', space=vmem, size = 0x12000, scoped, tag = 'internal scratch']
  #allocation2 [shape = 'f32[1,1]{1,0:T(1,128)S(1)}', space=vmem, size = 0x200, scoped, tag = 'scoped memory for tpu_custom_call.1']
  %s0 = inlined_call_operand.vmem [shape: f32[2,32], index: 0, kind: input, shape index: {}]
  %s1 = inlined_call_operand.hbm [shape: f32[2,8,32], index: 1, kind: input, shape index: {}]
  %s2 = inlined_call_operand.vmem [shape: s32[2,1], index: 2, kind: input, shape index: {}]
  %s3 = inlined_call_operand.hbm [shape: f32[3,2,4], index: 3, kind: input, shape index: {}]
  %s4 = inlined_call_operand.hbm [shape: f32[1,32], index: 4, kind: input, shape index: {}]
  %s5 = inlined_call_operand.vmem [shape: f32[32,96], index: 5, kind: input, shape index: {}]
  %s6 = inlined_call_operand.hbm [shape: f32[1,96], index: 6, kind: input, shape index: {}]
  %s7 = inlined_call_operand.vmem [shape: f32[32,32], index: 7, kind: input, shape index: {}]
  %s8 = inlined_call_operand.hbm [shape: f32[32,32], index: 8, kind: input, shape index: {}]
  %s9 = inlined_call_operand.vmem [shape: f32[1,32], index: 9, kind: input, shape index: {}]
  %s10 = inlined_call_operand.hbm [shape: f32[32,32], index: 10, kind: input, shape index: {}]
  %s11 = inlined_call_operand.vmem [shape: f32[1,32], index: 11, kind: input, shape index: {}]
  %s12 = inlined_call_operand.vmem [shape: f32[32,4], index: 12, kind: input, shape index: {}]
  %s13 = inlined_call_operand.vmem [shape: f32[1,4], index: 13, kind: input, shape index: {}]
  %s14 = inlined_call_operand.vmem [shape: f32[1,32], index: 14, kind: input, shape index: {}]
  %s15 = inlined_call_operand.<no memory space> [shape: f32[1,1], index: 15, kind: input, shape index: {}]
  %s16 = inlined_call_operand.hbm [shape: f32[3,2,4], index: 16, kind: output, shape index: {0}]
  %s17 = inlined_call_operand.hbm [shape: f32[3,2,4], index: 17, kind: output, shape index: {1}]
  %s18 = inlined_call_operand.hbm [shape: f32[3,2,32], index: 18, kind: output, shape index: {2}]
  %s19 = inlined_call_operand.hbm [shape: f32[3,2,8], index: 19, kind: output, shape index: {3}]
  %20 = xla_tuple %s16, %s17, %s18, %s19
  %s21 = sld [smem:[#allocation0]]
  $region122: #{tpu_custom_call.1} parent=0
    _
  %s23 = ssub.s32 1, %s21
  %s24 = scalar_select 0, %s23, %s21
  %v25 = vstv %s15
  %26 = vst [vmem:[#allocation2] sm:$0x1] %v25
  $region1: #{tpu_custom_call.1} parent=0
    #allocation3 [shape = 'u8[8192]{0}', space=vmem, size = 0x2000, scoped, tag = 'input window, operand 1, single buffered']
    #allocation4 [shape = 's32[1]{0}', space=sflag, size = 0x4, scoped, tag = 'scoped memory for tpu_custom_call.1']
    #allocation5 [shape = 's32[1]{0}', space=sflag, size = 0x4, scoped, tag = 'scoped memory for tpu_custom_call.1']
    #allocation6 [shape = 'u8[3072]{0}', space=vmem, size = 0xc00, scoped, tag = 'input window, operand 3, single buffered']
    #allocation7 [shape = 's32[1]{0}', space=sflag, size = 0x4, scoped, tag = 'scoped memory for tpu_custom_call.1']
    #allocation8 [shape = 'u8[512]{0}', space=vmem, size = 0x400, scoped, tag = 'input window, operand 4, single buffered']
    #allocation9 [shape = 'u8[512]{0}', space=vmem, size = 0x400, scoped, tag = 'input window, operand 6, single buffered']
    #allocation10 [shape = 's32[1]{0}', space=sflag, size = 0x4, scoped, tag = 'scoped memory for tpu_custom_call.1']
    #allocation11 [shape = 'u8[16384]{0}', space=vmem, size = 0x4000, scoped, tag = 'input window, operand 8, single buffered']
    #allocation12 [shape = 'u8[16384]{0}', space=vmem, size = 0x4000, scoped, tag = 'input window, operand 10, single buffered']
    #allocation13 [shape = 's32[1]{0}', space=sflag, size = 0x4, scoped, tag = 'scoped memory for tpu_custom_call.1']
    #allocation14 [shape = 'u8[3072]{0}', space=vmem, size = 0xc00, scoped, tag = 'output window, operand 0, single buffered']
    #allocation15 [shape = 'u8[3072]{0}', space=vmem, size = 0xc00, scoped, tag = 'output window, operand 1, single buffered']
    #allocation16 [shape = 's32[1]{0}', space=sflag, size = 0x4, scoped, tag = 'scoped memory for tpu_custom_call.1']
    #allocation17 [shape = 'u8[3072]{0}', space=vmem, size = 0xc00, scoped, tag = 'output window, operand 2, single buffered']
    #allocation18 [shape = 'u8[3072]{0}', space=vmem, size = 0xc00, scoped, tag = 'output window, operand 3, single buffered']
    #allocation19 [shape = 's32[1]{0}', space=sflag, size = 0x4, scoped, tag = 'scoped memory for tpu_custom_call.1']
    %27 = vsyncpa [#allocation4], 0
    %28 = vsyncpa [#allocation7], 0
    %29 = vsyncpa [#allocation10], 0
    %30 = vsyncpa [#allocation13], 0
    %31 = vsyncpa [#allocation5], 0
    %32 = vsyncpa [#allocation16], 0
    %33 = vsyncpa [#allocation19], 0
    // Predicated region
    $region2: #{tpu_custom_call.1} parent=1 // pred_check
      _
    $region3: #{tpu_custom_call.1} parent=1 // pred_check_branch
      %35 = sbr.rel (0) target = $region5
    $region4: #{tpu_custom_call.1} parent=1 // pred_region
      _
    $region5: #{tpu_custom_call.1} parent=1 // pred_fallthru
      _
    // Predicated region
    $region6: #{tpu_custom_call.1} parent=1 // pred_check
      _
    $region7: #{tpu_custom_call.1} parent=1 // pred_check_branch
      %37 = sbr.rel (0) target = $region9
    $region8: #{tpu_custom_call.1} parent=1 // pred_region
      %s39 = ssub.s32 256, 256
      %40 = vsyncadd [#allocation4], %s39
      %s41 = sshll.u32 [#allocation3], 4
      %s42 = int_to_ptr.vmem [resolvable:$true] %s41
      %47 = dma.hbm_to_vmem [thread:$0]  %s1, 256, %s42, [#allocation4], 128, 128, 8
    $region9: #{tpu_custom_call.1} parent=1 // pred_fallthru
      _
    // Predicated region
    $region10: #{tpu_custom_call.1} parent=1 // pred_check
      _
    $region11: #{tpu_custom_call.1} parent=1 // pred_check_branch
      %49 = sbr.rel (0) target = $region13
    $region12: #{tpu_custom_call.1} parent=1 // pred_region
      _
    $region13: #{tpu_custom_call.1} parent=1 // pred_fallthru
      _
    // Predicated region
    $region14: #{tpu_custom_call.1} parent=1 // pred_check
      _
    $region15: #{tpu_custom_call.1} parent=1 // pred_check_branch
      %51 = sbr.rel (0) target = $region17
    $region16: #{tpu_custom_call.1} parent=1 // pred_region
      %s53 = ssub.s32 96, 96
      %54 = vsyncadd [#allocation7], %s53
      %s55 = sshll.u32 [#allocation6], 4
      %s56 = int_to_ptr.vmem [resolvable:$true] %s55
      %61 = dma.hbm_to_vmem [thread:$0]  %s3, 96, %s56, [#allocation7], 32, 32, 2
    $region17: #{tpu_custom_call.1} parent=1 // pred_fallthru
      _
    // Predicated region
    $region18: #{tpu_custom_call.1} parent=1 // pred_check
      _
    $region19: #{tpu_custom_call.1} parent=1 // pred_check_branch
      %63 = sbr.rel (0) target = $region21
    $region20: #{tpu_custom_call.1} parent=1 // pred_region
      %s65 = ssub.s32 16, 16
      %66 = vsyncadd [#allocation7], %s65
      %s68 = sshll.u32 [#allocation8], 4
      %s69 = int_to_ptr.vmem [resolvable:$true] %s68
      %71 = dma.hbm_to_vmem [thread:$0]  %s4, 16, %s69, [#allocation7]
    $region21: #{tpu_custom_call.1} parent=1 // pred_fallthru
      _
    // Predicated region
    $region22: #{tpu_custom_call.1} parent=1 // pred_check
      _
    $region23: #{tpu_custom_call.1} parent=1 // pred_check_branch
      %73 = sbr.rel (0) target = $region25
    $region24: #{tpu_custom_call.1} parent=1 // pred_region
      _
    $region25: #{tpu_custom_call.1} parent=1 // pred_fallthru
      _
    // Predicated region
    $region26: #{tpu_custom_call.1} parent=1 // pred_check
      _
    $region27: #{tpu_custom_call.1} parent=1 // pred_check_branch
      %75 = sbr.rel (0) target = $region29
    $region28: #{tpu_custom_call.1} parent=1 // pred_region
      %s77 = ssub.s32 16, 16
      %78 = vsyncadd [#allocation10], %s77
      %s80 = sshll.u32 [#allocation9], 4
      %s81 = int_to_ptr.vmem [resolvable:$true] %s80
      %83 = dma.hbm_to_vmem [thread:$0]  %s6, 16, %s81, [#allocation10]
    $region29: #{tpu_custom_call.1} parent=1 // pred_fallthru
      _
    // Predicated region
    $region30: #{tpu_custom_call.1} parent=1 // pred_check
      _
    $region31: #{tpu_custom_call.1} parent=1 // pred_check_branch
      %85 = sbr.rel (0) target = $region33
    $region32: #{tpu_custom_call.1} parent=1 // pred_region
      _
    $region33: #{tpu_custom_call.1} parent=1 // pred_fallthru
      _
    // Predicated region
    $region34: #{tpu_custom_call.1} parent=1 // pred_check
      _
    $region35: #{tpu_custom_call.1} parent=1 // pred_check_branch
      %87 = sbr.rel (0) target = $region37
    $region36: #{tpu_custom_call.1} parent=1 // pred_region
      %s89 = ssub.s32 512, 512
      %90 = vsyncadd [#allocation10], %s89
      %s91 = sshll.u32 [#allocation11], 4
      %s92 = int_to_ptr.vmem [resolvable:$true] %s91
      %97 = dma.hbm_to_vmem [thread:$0]  %s8, 512, %s92, [#allocation10], 128, 128, 8
    $region37: #{tpu_custom_call.1} parent=1 // pred_fallthru
      _
    // Predicated region
    $region38: #{tpu_custom_call.1} parent=1 // pred_check
      _
    $region39: #{tpu_custom_call.1} parent=1 // pred_check_branch
      %99 = sbr.rel (0) target = $region41
    $region40: #{tpu_custom_call.1} parent=1 // pred_region
      _
    $region41: #{tpu_custom_call.1} parent=1 // pred_fallthru
      _
    // Predicated region
    $region42: #{tpu_custom_call.1} parent=1 // pred_check
      _
    $region43: #{tpu_custom_call.1} parent=1 // pred_check_branch
      %101 = sbr.rel (0) target = $region45
    $region44: #{tpu_custom_call.1} parent=1 // pred_region
      %s103 = ssub.s32 512, 512
      %104 = vsyncadd [#allocation13], %s103
      %s105 = sshll.u32 [#allocation12], 4
      %s106 = int_to_ptr.vmem [resolvable:$true] %s105
      %111 = dma.hbm_to_vmem [thread:$0]  %s10, 512, %s106, [#allocation13], 128, 128, 8
    $region45: #{tpu_custom_call.1} parent=1 // pred_fallthru
      _
    // Predicated region
    $region46: #{tpu_custom_call.1} parent=1 // pred_check
      _
    $region47: #{tpu_custom_call.1} parent=1 // pred_check_branch
      %113 = sbr.rel (0) target = $region49
    $region48: #{tpu_custom_call.1} parent=1 // pred_region
      _
    $region49: #{tpu_custom_call.1} parent=1 // pred_fallthru
      _
    // Predicated region
    $region50: #{tpu_custom_call.1} parent=1 // pred_check
      _
    $region51: #{tpu_custom_call.1} parent=1 // pred_check_branch
      %115 = sbr.rel (0) target = $region53
    $region52: #{tpu_custom_call.1} parent=1 // pred_region
      _
    $region53: #{tpu_custom_call.1} parent=1 // pred_fallthru
      _
    // Predicated region
    $region54: #{tpu_custom_call.1} parent=1 // pred_check
      _
    $region55: #{tpu_custom_call.1} parent=1 // pred_check_branch
      %117 = sbr.rel (0) target = $region57
    $region56: #{tpu_custom_call.1} parent=1 // pred_region
      _
    $region57: #{tpu_custom_call.1} parent=1 // pred_fallthru
      _
    // Predicated region
    $region58: #{tpu_custom_call.1} parent=1 // pred_check
      _
    $region59: #{tpu_custom_call.1} parent=1 // pred_check_branch
      %119 = sbr.rel (0) target = $region61
    $region60: #{tpu_custom_call.1} parent=1 // pred_region
      _
    $region61: #{tpu_custom_call.1} parent=1 // pred_fallthru
      _
    // Predicated region
    $region62: #{tpu_custom_call.1} parent=1 // pred_check
      _
    $region63: #{tpu_custom_call.1} parent=1 // pred_check_branch
      %121 = sbr.rel (0) target = $region65
    $region64: #{tpu_custom_call.1} parent=1 // pred_region
      _
    $region65: #{tpu_custom_call.1} parent=1 // pred_fallthru
      _
    // Predicated region
    $region66: #{tpu_custom_call.1} parent=1 // pred_check
      _
    $region67: #{tpu_custom_call.1} parent=1 // pred_check_branch
      %123 = sbr.rel (0) target = $region69
    $region68: #{tpu_custom_call.1} parent=1 // pred_region
      %124 = dma.done [#allocation4], 256
    $region69: #{tpu_custom_call.1} parent=1 // pred_fallthru
      _
    // Predicated region
    $region70: #{tpu_custom_call.1} parent=1 // pred_check
      _
    $region71: #{tpu_custom_call.1} parent=1 // pred_check_branch
      %126 = sbr.rel (0) target = $region73
    $region72: #{tpu_custom_call.1} parent=1 // pred_region
      %127 = dma.done [#allocation7], 96
    $region73: #{tpu_custom_call.1} parent=1 // pred_fallthru
      _
    // Predicated region
    $region74: #{tpu_custom_call.1} parent=1 // pred_check
      _
    $region75: #{tpu_custom_call.1} parent=1 // pred_check_branch
      %129 = sbr.rel (0) target = $region77
    $region76: #{tpu_custom_call.1} parent=1 // pred_region
      %130 = dma.done [#allocation7], 16
    $region77: #{tpu_custom_call.1} parent=1 // pred_fallthru
      _
    // Predicated region
    $region78: #{tpu_custom_call.1} parent=1 // pred_check
      _
    $region79: #{tpu_custom_call.1} parent=1 // pred_check_branch
      %132 = sbr.rel (0) target = $region81
    $region80: #{tpu_custom_call.1} parent=1 // pred_region
      %133 = dma.done [#allocation10], 16
    $region81: #{tpu_custom_call.1} parent=1 // pred_fallthru
      _
    // Predicated region
    $region82: #{tpu_custom_call.1} parent=1 // pred_check
      _
    $region83: #{tpu_custom_call.1} parent=1 // pred_check_branch
      %135 = sbr.rel (0) target = $region85
    $region84: #{tpu_custom_call.1} parent=1 // pred_region
      %136 = dma.done [#allocation10], 512
    $region85: #{tpu_custom_call.1} parent=1 // pred_fallthru
      _
    // Predicated region
    $region86: #{tpu_custom_call.1} parent=1 // pred_check
      _
    $region87: #{tpu_custom_call.1} parent=1 // pred_check_branch
      %138 = sbr.rel (0) target = $region89
    $region88: #{tpu_custom_call.1} parent=1 // pred_region
      %139 = dma.done [#allocation13], 512
    $region89: #{tpu_custom_call.1} parent=1 // pred_fallthru
      _
    %v140 = vld [vmem:[%s0] sm:$0x3]
    %v141 = vld [vmem:[#allocation3] sm:$0xff]
    %v142 = vld [vmem:[#allocation3 + $0x8] sm:$0xff]
    %v143 = vld [vmem:[%s5] sm:$0xff]
    %v144 = vld [vmem:[%s5 + $0x8] sm:$0xff]
    %v145 = vld [vmem:[%s5 + $0x10] sm:$0xff]
    %v146 = vld [vmem:[%s5 + $0x18] sm:$0xff]
    %v147 = vld [vmem:[#allocation9] sm:$0x1]
    %v149 = vlaneseq
    %v150 = vshrl.u32 %v149, 7
    %v151 = vsub.s32 0, %v150
    %v152 = vrot.slane %v147, %v151
    %vm154 = vcmask 261120
    %v156 = vsel %vm154, %v140, 0
    %158 = vmatprep.subr.mxu0 0.0
    %159 = vmatpush1.msra.mxu0 %v143
    %160 = vmatprep.subr.mxu0 0.0
    %161 = vmatpush1.msra.mxu0 %v144
    %162 = vmatprep.subr.mxu0 0.0
    %163 = vmatpush1.msra.mxu0 %v145
    %164 = vmatprep.subr.mxu0 0.0
    %165 = vmatpush1.msra.mxu0 %v146
    %166 = vmatprep.subr.mxu0 0.0
    %167 = vmatpush1.msra.mxu0 0.0
    %168 = vmatprep.subr.mxu0 0.0
    %169 = vmatpush1.msra.mxu0 0.0
    %170 = vmatprep.subr.mxu0 0.0
    %171 = vmatpush1.msra.mxu0 0.0
    %172 = vmatprep.subr.mxu0 0.0
    %173 = vmatpush1.msra.mxu0 0.0
    %174 = vmatprep.subr.mxu0 0.0
    %175 = vmatpush1.msra.mxu0 0.0
    %176 = vmatprep.subr.mxu0 0.0
    %177 = vmatpush1.msra.mxu0 0.0
    %178 = vmatprep.subr.mxu0 0.0
    %179 = vmatpush1.msra.mxu0 0.0
    %180 = vmatprep.subr.mxu0 0.0
    %181 = vmatpush1.msra.mxu0 0.0
    %182 = vmatprep.subr.mxu0 0.0
    %183 = vmatpush1.msra.mxu0 0.0
    %184 = vmatprep.subr.mxu0 0.0
    %185 = vmatpush1.msra.mxu0 0.0
    %186 = vmatprep.subr.mxu0 0.0
    %187 = vmatpush1.msra.mxu0 0.0
    %188 = vmatprep.subr.mxu0 0.0
    %189 = vmatpush1.msra.mxu0 0.0
    %190 = vmatprep.subr.mxu0 0.0
    %191 = vmatpush1.msra.mxu0 0.0
    %192 = vmatprep.subr.mxu0 0.0
    %193 = vmatpush1.msra.mxu0 0.0
    %194 = vmatprep.subr.mxu0 0.0
    %195 = vmatpush1.msra.mxu0 0.0
    %196 = vmatprep.subr.mxu0 0.0
    %197 = vmatpush1.msra.mxu0 0.0
    %198 = vmatprep.subr.mxu0 0.0
    %199 = vmatpush1.msra.mxu0 0.0
    %200 = vmatprep.subr.mxu0 0.0
    %201 = vmatpush1.msra.mxu0 0.0
    %202 = vmatprep.subr.mxu0 0.0
    %203 = vmatpush1.msra.mxu0 0.0
    %204 = vmatprep.subr.mxu0 0.0
    %205 = vmatpush1.msra.mxu0 0.0
    %206 = vmatprep.subr.mxu0 0.0
    %207 = vmatpush1.msra.mxu0 0.0
    %208 = vmatprep.subr.mxu0 0.0
    %209 = vmatpush1.msra.mxu0 0.0
    %210 = vmatprep.subr.mxu0 0.0
    %211 = vmatpush1.msra.mxu0 0.0
    %212 = vmatprep.subr.mxu0 0.0
    %213 = vmatpush1.msra.mxu0 0.0
    %214 = vmatprep.subr.mxu0 0.0
    %215 = vmatpush1.msra.mxu0 0.0
    %216 = vmatprep.subr.mxu0 0.0
    %217 = vmatpush1.msra.mxu0 0.0
    %218 = vmatprep.subr.mxu0 0.0
    %219 = vmatpush1.msra.mxu0 0.0
    %220 = vmatprep.subr.mxu0 0.0
    %221 = vmatpush1.msra.mxu0 0.0
    %222 = vmatprep.mubr.f32.mxu0 0.0
    %223 = vmatmul.mubr.f32.gmra.mrb[0].mxu0 %v156
    %v224 = vpop.f32.mrb[0].mxu0
    %v225 = vadd.f32 %v152, %v224
    %v226 = vpop.f32.mrb[0].mxu0
    %227 = vdwg.mxu0
    %v228 = vlaneseq
    %v229 = vand.u32 %v228, 127
    %v230 = vld [vmem:[%s2] sm:$0x3]
    %231 = vset.pattern.permute.xlu0 0
    %232 = vperm.xlu0 %231, %v230
    %v233 = vpop.permute.xlu0 %232
    %vm234 = vcmp.lt.s32.totalorder %v229, %v233
    %v235 = vld [vmem:[%s14] sm:$0x1]
    %v236 = vld [vmem:[#allocation2] sm:$0x1]
    %v237 = vld [vmem:[%s7] sm:$0xff]
    %v238 = vld [vmem:[%s7 + $0x8] sm:$0xff]
    %v239 = vld [vmem:[%s7 + $0x10] sm:$0xff]
    %v240 = vld [vmem:[%s7 + $0x18] sm:$0xff]
    %v241 = vld [vmem:[#allocation11] sm:$0xff]
    %v242 = vld [vmem:[#allocation11 + $0x8] sm:$0xff]
    %v243 = vld [vmem:[#allocation11 + $0x10] sm:$0xff]
    %v244 = vld [vmem:[#allocation11 + $0x18] sm:$0xff]
    %v245 = vld [vmem:[%s9] sm:$0x1]
    %v246 = vld [vmem:[#allocation12] sm:$0xff]
    %v247 = vld [vmem:[#allocation12 + $0x8] sm:$0xff]
    %v248 = vld [vmem:[#allocation12 + $0x10] sm:$0xff]
    %v249 = vld [vmem:[#allocation12 + $0x18] sm:$0xff]
    %v250 = vld [vmem:[%s11] sm:$0x1]
    %v251 = vld [vmem:[%s12] sm:$0xff]
    %v252 = vld [vmem:[%s12 + $0x8] sm:$0xff]
    %v253 = vld [vmem:[%s12 + $0x10] sm:$0xff]
    %v254 = vld [vmem:[%s12 + $0x18] sm:$0xff]
    %v255 = vld [vmem:[%s13] sm:$0x1]
    %v256 = vld [vmem:[#allocation8] sm:$0x1]
    %v258 = vlaneseq
    %v259 = vshrl.u32 %v258, 7
    %v260 = vsub.s32 0, %v259
    %v261 = vrot.slane %v256, %v260
    %v262 = vsel %vm154, %v261, 0
    %264 = vmatprep.subr.mxu0 0.0
    %265 = vmatpush1.msra.mxu0 %v241
    %266 = vmatprep.subr.mxu0 0.0
    %267 = vmatpush1.msra.mxu0 %v242
    %268 = vmatprep.subr.mxu0 0.0
    %269 = vmatpush1.msra.mxu0 %v243
    %270 = vmatprep.subr.mxu0 0.0
    %271 = vmatpush1.msra.mxu0 %v244
    %272 = vmatprep.subr.mxu0 0.0
    %273 = vmatpush1.msra.mxu0 0.0
    %274 = vmatprep.subr.mxu0 0.0
    %275 = vmatpush1.msra.mxu0 0.0
    %276 = vmatprep.subr.mxu0 0.0
    %277 = vmatpush1.msra.mxu0 0.0
    %278 = vmatprep.subr.mxu0 0.0
    %279 = vmatpush1.msra.mxu0 0.0
    %280 = vmatprep.subr.mxu0 0.0
    %281 = vmatpush1.msra.mxu0 0.0
    %282 = vmatprep.subr.mxu0 0.0
    %283 = vmatpush1.msra.mxu0 0.0
    %284 = vmatprep.subr.mxu0 0.0
    %285 = vmatpush1.msra.mxu0 0.0
    %286 = vmatprep.subr.mxu0 0.0
    %287 = vmatpush1.msra.mxu0 0.0
    %288 = vmatprep.subr.mxu0 0.0
    %289 = vmatpush1.msra.mxu0 0.0
    %290 = vmatprep.subr.mxu0 0.0
    %291 = vmatpush1.msra.mxu0 0.0
    %292 = vmatprep.subr.mxu0 0.0
    %293 = vmatpush1.msra.mxu0 0.0
    %294 = vmatprep.subr.mxu0 0.0
    %295 = vmatpush1.msra.mxu0 0.0
    %296 = vmatprep.subr.mxu0 0.0
    %297 = vmatpush1.msra.mxu0 0.0
    %298 = vmatprep.subr.mxu0 0.0
    %299 = vmatpush1.msra.mxu0 0.0
    %300 = vmatprep.subr.mxu0 0.0
    %301 = vmatpush1.msra.mxu0 0.0
    %302 = vmatprep.subr.mxu0 0.0
    %303 = vmatpush1.msra.mxu0 0.0
    %304 = vmatprep.subr.mxu0 0.0
    %305 = vmatpush1.msra.mxu0 0.0
    %306 = vmatprep.subr.mxu0 0.0
    %307 = vmatpush1.msra.mxu0 0.0
    %308 = vmatprep.subr.mxu0 0.0
    %309 = vmatpush1.msra.mxu0 0.0
    %310 = vmatprep.subr.mxu0 0.0
    %311 = vmatpush1.msra.mxu0 0.0
    %312 = vmatprep.subr.mxu0 0.0
    %313 = vmatpush1.msra.mxu0 0.0
    %314 = vmatprep.subr.mxu0 0.0
    %315 = vmatpush1.msra.mxu0 0.0
    %316 = vmatprep.subr.mxu0 0.0
    %317 = vmatpush1.msra.mxu0 0.0
    %318 = vmatprep.subr.mxu0 0.0
    %319 = vmatpush1.msra.mxu0 0.0
    %320 = vmatprep.subr.mxu0 0.0
    %321 = vmatpush1.msra.mxu0 0.0
    %322 = vmatprep.subr.mxu0 0.0
    %323 = vmatpush1.msra.mxu0 0.0
    %324 = vmatprep.subr.mxu0 0.0
    %325 = vmatpush1.msra.mxu0 0.0
    %326 = vmatprep.subr.mxu0 0.0
    %327 = vmatpush1.msra.mxu0 0.0
    %328 = vmatprep.mubr.f32.mxu0 0.0
    %329 = vmatmul.mubr.f32.gmra.mrb[0].mxu0 %v262
    %v330 = vpop.f32.mrb[0].mxu0
    %v331 = vadd.f32 0.0, %v330
    %v332 = vpop.f32.mrb[0].mxu0
    %333 = vdwg.mxu0
    %v335 = vsel %vm154, %v225, 0
    %337 = vmatprep.subr.mxu0 0.0
    %338 = vmatpush1.msra.mxu0 %v237
    %339 = vmatprep.subr.mxu0 0.0
    %340 = vmatpush1.msra.mxu0 %v238
    %341 = vmatprep.subr.mxu0 0.0
    %342 = vmatpush1.msra.mxu0 %v239
    %343 = vmatprep.subr.mxu0 0.0
    %344 = vmatpush1.msra.mxu0 %v240
    %345 = vmatprep.subr.mxu0 0.0
    %346 = vmatpush1.msra.mxu0 0.0
    %347 = vmatprep.subr.mxu0 0.0
    %348 = vmatpush1.msra.mxu0 0.0
    %349 = vmatprep.subr.mxu0 0.0
    %350 = vmatpush1.msra.mxu0 0.0
    %351 = vmatprep.subr.mxu0 0.0
    %352 = vmatpush1.msra.mxu0 0.0
    %353 = vmatprep.subr.mxu0 0.0
    %354 = vmatpush1.msra.mxu0 0.0
    %355 = vmatprep.subr.mxu0 0.0
    %356 = vmatpush1.msra.mxu0 0.0
    %357 = vmatprep.subr.mxu0 0.0
    %358 = vmatpush1.msra.mxu0 0.0
    %359 = vmatprep.subr.mxu0 0.0
    %360 = vmatpush1.msra.mxu0 0.0
    %361 = vmatprep.subr.mxu0 0.0
    %362 = vmatpush1.msra.mxu0 0.0
    %363 = vmatprep.subr.mxu0 0.0
    %364 = vmatpush1.msra.mxu0 0.0
    %365 = vmatprep.subr.mxu0 0.0
    %366 = vmatpush1.msra.mxu0 0.0
    %367 = vmatprep.subr.mxu0 0.0
    %368 = vmatpush1.msra.mxu0 0.0
    %369 = vmatprep.subr.mxu0 0.0
    %370 = vmatpush1.msra.mxu0 0.0
    %371 = vmatprep.subr.mxu0 0.0
    %372 = vmatpush1.msra.mxu0 0.0
    %373 = vmatprep.subr.mxu0 0.0
    %374 = vmatpush1.msra.mxu0 0.0
    %375 = vmatprep.subr.mxu0 0.0
    %376 = vmatpush1.msra.mxu0 0.0
    %377 = vmatprep.subr.mxu0 0.0
    %378 = vmatpush1.msra.mxu0 0.0
    %379 = vmatprep.subr.mxu0 0.0
    %380 = vmatpush1.msra.mxu0 0.0
    %381 = vmatprep.subr.mxu0 0.0
    %382 = vmatpush1.msra.mxu0 0.0
    %383 = vmatprep.subr.mxu0 0.0
    %384 = vmatpush1.msra.mxu0 0.0
    %385 = vmatprep.subr.mxu0 0.0
    %386 = vmatpush1.msra.mxu0 0.0
    %387 = vmatprep.subr.mxu0 0.0
    %388 = vmatpush1.msra.mxu0 0.0
    %389 = vmatprep.subr.mxu0 0.0
    %390 = vmatpush1.msra.mxu0 0.0
    %391 = vmatprep.subr.mxu0 0.0
    %392 = vmatpush1.msra.mxu0 0.0
    %393 = vmatprep.subr.mxu0 0.0
    %394 = vmatpush1.msra.mxu0 0.0
    %395 = vmatprep.subr.mxu0 0.0
    %396 = vmatpush1.msra.mxu0 0.0
    %397 = vmatprep.subr.mxu0 0.0
    %398 = vmatpush1.msra.mxu0 0.0
    %399 = vmatprep.subr.mxu0 0.0
    %400 = vmatpush1.msra.mxu0 0.0
    %401 = vmatprep.mubr.f32.mxu0 0.0
    %402 = vmatmul.mubr.f32.gmra.mrb[0].mxu0 %v335
    %v403 = vpop.f32.mrb[0].mxu0
    %v404 = vadd.f32 %v331, %v403
    %v405 = vpop.f32.mrb[0].mxu0
    %406 = vdwg.mxu0
    %v408 = vlaneseq
    %v409 = vshrl.u32 %v408, 7
    %v410 = vsub.s32 0, %v409
    %v411 = vrot.slane %v245, %v410
    %v413 = vadd.f32 %v404, %v411
    %v415 = vlaneseq
    %v416 = vshrl.u32 %v415, 7
    %v417 = vsub.s32 0, %v416
    %v418 = vrot.slane %v250, %v417
    %v421 = vsel %vm154, %v413, 0
    %423 = vmatprep.subr.mxu0 0.0
    %424 = vmatpush1.msra.mxu0 %v246
    %425 = vmatprep.subr.mxu0 0.0
    %426 = vmatpush1.msra.mxu0 %v247
    %427 = vmatprep.subr.mxu0 0.0
    %428 = vmatpush1.msra.mxu0 %v248
    %429 = vmatprep.subr.mxu0 0.0
    %430 = vmatpush1.msra.mxu0 %v249
    %431 = vmatprep.subr.mxu0 0.0
    %432 = vmatpush1.msra.mxu0 0.0
    %433 = vmatprep.subr.mxu0 0.0
    %434 = vmatpush1.msra.mxu0 0.0
    %435 = vmatprep.subr.mxu0 0.0
    %436 = vmatpush1.msra.mxu0 0.0
    %437 = vmatprep.subr.mxu0 0.0
    %438 = vmatpush1.msra.mxu0 0.0
    %439 = vmatprep.subr.mxu0 0.0
    %440 = vmatpush1.msra.mxu0 0.0
    %441 = vmatprep.subr.mxu0 0.0
    %442 = vmatpush1.msra.mxu0 0.0
    %443 = vmatprep.subr.mxu0 0.0
    %444 = vmatpush1.msra.mxu0 0.0
    %445 = vmatprep.subr.mxu0 0.0
    %446 = vmatpush1.msra.mxu0 0.0
    %447 = vmatprep.subr.mxu0 0.0
    %448 = vmatpush1.msra.mxu0 0.0
    %449 = vmatprep.subr.mxu0 0.0
    %450 = vmatpush1.msra.mxu0 0.0
    %451 = vmatprep.subr.mxu0 0.0
    %452 = vmatpush1.msra.mxu0 0.0
    %453 = vmatprep.subr.mxu0 0.0
    %454 = vmatpush1.msra.mxu0 0.0
    %455 = vmatprep.subr.mxu0 0.0
    %456 = vmatpush1.msra.mxu0 0.0
    %457 = vmatprep.subr.mxu0 0.0
    %458 = vmatpush1.msra.mxu0 0.0
    %459 = vmatprep.subr.mxu0 0.0
    %460 = vmatpush1.msra.mxu0 0.0
    %461 = vmatprep.subr.mxu0 0.0
    %462 = vmatpush1.msra.mxu0 0.0
    %463 = vmatprep.subr.mxu0 0.0
    %464 = vmatpush1.msra.mxu0 0.0
    %465 = vmatprep.subr.mxu0 0.0
    %466 = vmatpush1.msra.mxu0 0.0
    %467 = vmatprep.subr.mxu0 0.0
    %468 = vmatpush1.msra.mxu0 0.0
    %469 = vmatprep.subr.mxu0 0.0
    %470 = vmatpush1.msra.mxu0 0.0
    %471 = vmatprep.subr.mxu0 0.0
    %472 = vmatpush1.msra.mxu0 0.0
    %473 = vmatprep.subr.mxu0 0.0
    %474 = vmatpush1.msra.mxu0 0.0
    %475 = vmatprep.subr.mxu0 0.0
    %476 = vmatpush1.msra.mxu0 0.0
    %477 = vmatprep.subr.mxu0 0.0
    %478 = vmatpush1.msra.mxu0 0.0
    %479 = vmatprep.subr.mxu0 0.0
    %480 = vmatpush1.msra.mxu0 0.0
    %481 = vmatprep.subr.mxu0 0.0
    %482 = vmatpush1.msra.mxu0 0.0
    %483 = vmatprep.subr.mxu0 0.0
    %484 = vmatpush1.msra.mxu0 0.0
    %485 = vmatprep.subr.mxu0 0.0
    %486 = vmatpush1.msra.mxu0 0.0
    %487 = vmatprep.mubr.f32.mxu0 0.0
    %488 = vmatmul.mubr.f32.gmra.mrb[0].mxu0 %v421
    %v489 = vpop.f32.mrb[0].mxu0
    %v490 = vadd.f32 %v418, %v489
    %v491 = vpop.f32.mrb[0].mxu0
    %492 = vdwg.mxu0
    %v493 = vmax.f32 %v490, 0.0
    %v495 = vlaneseq
    %v496 = vshrl.u32 %v495, 7
    %v497 = vsub.s32 0, %v496
    %v498 = vrot.slane %v255, %v497
    %v501 = vsel %vm154, %v493, 0
    %503 = vmatprep.subr.mxu0 0.0
    %504 = vmatpush1.msra.mxu0 %v251
    %505 = vmatprep.subr.mxu0 0.0
    %506 = vmatpush1.msra.mxu0 %v252
    %507 = vmatprep.subr.mxu0 0.0
    %508 = vmatpush1.msra.mxu0 %v253
    %509 = vmatprep.subr.mxu0 0.0
    %510 = vmatpush1.msra.mxu0 %v254
    %511 = vmatprep.subr.mxu0 0.0
    %512 = vmatpush1.msra.mxu0 0.0
    %513 = vmatprep.subr.mxu0 0.0
    %514 = vmatpush1.msra.mxu0 0.0
    %515 = vmatprep.subr.mxu0 0.0
    %516 = vmatpush1.msra.mxu0 0.0
    %517 = vmatprep.subr.mxu0 0.0
    %518 = vmatpush1.msra.mxu0 0.0
    %519 = vmatprep.subr.mxu0 0.0
    %520 = vmatpush1.msra.mxu0 0.0
    %521 = vmatprep.subr.mxu0 0.0
    %522 = vmatpush1.msra.mxu0 0.0
    %523 = vmatprep.subr.mxu0 0.0
    %524 = vmatpush1.msra.mxu0 0.0
    %525 = vmatprep.subr.mxu0 0.0
    %526 = vmatpush1.msra.mxu0 0.0
    %527 = vmatprep.subr.mxu0 0.0
    %528 = vmatpush1.msra.mxu0 0.0
    %529 = vmatprep.subr.mxu0 0.0
    %530 = vmatpush1.msra.mxu0 0.0
    %531 = vmatprep.subr.mxu0 0.0
    %532 = vmatpush1.msra.mxu0 0.0
    %533 = vmatprep.subr.mxu0 0.0
    %534 = vmatpush1.msra.mxu0 0.0
    %535 = vmatprep.subr.mxu0 0.0
    %536 = vmatpush1.msra.mxu0 0.0
    %537 = vmatprep.subr.mxu0 0.0
    %538 = vmatpush1.msra.mxu0 0.0
    %539 = vmatprep.subr.mxu0 0.0
    %540 = vmatpush1.msra.mxu0 0.0
    %541 = vmatprep.subr.mxu0 0.0
    %542 = vmatpush1.msra.mxu0 0.0
    %543 = vmatprep.subr.mxu0 0.0
    %544 = vmatpush1.msra.mxu0 0.0
    %545 = vmatprep.subr.mxu0 0.0
    %546 = vmatpush1.msra.mxu0 0.0
    %547 = vmatprep.subr.mxu0 0.0
    %548 = vmatpush1.msra.mxu0 0.0
    %549 = vmatprep.subr.mxu0 0.0
    %550 = vmatpush1.msra.mxu0 0.0
    %551 = vmatprep.subr.mxu0 0.0
    %552 = vmatpush1.msra.mxu0 0.0
    %553 = vmatprep.subr.mxu0 0.0
    %554 = vmatpush1.msra.mxu0 0.0
    %555 = vmatprep.subr.mxu0 0.0
    %556 = vmatpush1.msra.mxu0 0.0
    %557 = vmatprep.subr.mxu0 0.0
    %558 = vmatpush1.msra.mxu0 0.0
    %559 = vmatprep.subr.mxu0 0.0
    %560 = vmatpush1.msra.mxu0 0.0
    %561 = vmatprep.subr.mxu0 0.0
    %562 = vmatpush1.msra.mxu0 0.0
    %563 = vmatprep.subr.mxu0 0.0
    %564 = vmatpush1.msra.mxu0 0.0
    %565 = vmatprep.subr.mxu0 0.0
    %566 = vmatpush1.msra.mxu0 0.0
    %567 = vmatprep.mubr.f32.mxu0 0.0
    %568 = vmatmul.mubr.f32.gmra.mrb[0].mxu0 %v501
    %v569 = vpop.f32.mrb[0].mxu0
    %v570 = vadd.f32 %v498, %v569
    %v571 = vpop.f32.mrb[0].mxu0
    %572 = vdwg.mxu0
    %vm573 = vcmask 25600
    %574 = vst.msk [vmem:[#allocation14] sm:$0x3] %vm573, %v570
    %v575 = vld [vmem:[#allocation6] sm:$0x3]
    %v576 = vadd.f32 %v570, %v575
    %v577 = vsel %vm573, %v576, -inf
    %578 = vmax.xlane.f32.xlu0 %v577
    %v579 = vpop.xlane.xlu0 %578
    %v580 = vsub.f32 %v576, %v579
    %v581 = vmul.f32 %v580, 1.442695
    %v582 = vpow.pop %v581
    %v583 = vsel %vm573, %v582, 0.0
    %584 = vadd.xlane.f32.xlu0 %v583
    %v585 = vpop.xlane.xlu0 %584
    %v586 = vrcp.pop %v585
    %v587 = vmul.f32 %v582, %v586
    %588 = vst.msk [vmem:[#allocation15] sm:$0x3] %vm573, %v587
    %v590 = vlaneseq
    %v591 = vshrl.u32 %v590, 7
    %v592 = vsub.s32 0, %v591
    %v593 = vrot.slane %v235, %v592
    %v595 = vmul.f32 %v413, %v593
    %v598 = vunpack.c.l.s4 1966171168
    %v599 = vunpack.c.0.s8 %v598
    %v600 = vlaneseq
    %v601 = vshrl.u32 %v600, 7
    %v602 = vsub.s32 %v599, %v601
    %v603 = vrot.slane %v595, %v602
    %v604 = vcombine.high %v603, %v603
    %v606 = vunpack.c.l.s4 1966171168
    %v607 = vunpack.c.0.s8 %v606
    %v608 = vlaneseq
    %v609 = vshrl.u32 %v608, 7
    %v610 = vsub.s32 %v607, %v609
    %v611 = vrot.slane %v603, %v610
    %v613 = vunpack.c.l.s4 1966171168
    %v614 = vunpack.c.0.s8 %v613
    %v615 = vlaneseq
    %v616 = vshrl.u32 %v615, 7
    %v617 = vsub.s32 %v614, %v616
    %v618 = vrot.slane %v604, %v617
    %v619 = vlaneseq
    %v620 = vshrl.u32 %v619, 7
    %v621 = vsub.s32 0, %v620
    %v622 = vrot.slane %v611, %v621
    %v623 = vlaneseq
    %v624 = vshrl.u32 %v623, 7
    %v625 = vsub.s32 0, %v624
    %v626 = vrot.slane %v618, %v625
    %v629 = vmul.f32 %v141, %v622
    %v630 = vmul.f32 %v142, %v626
    %v631 = vsel %vm154, %v629, 0.0
    %632 = vadd.xlane.f32.xlu0 %v631
    %v633 = vpop.xlane.xlu0 %632
    %v634 = vsel %vm154, %v630, 0.0
    %635 = vadd.xlane.f32.xlu0 %v634
    %v636 = vpop.xlane.xlu0 %635
    %v638 = vlaneseq
    %v639 = vshrl.u32 %v638, 7
    %v640 = vsub.s32 0, %v639
    %v641 = vrot.slane %v236, %v640
    %642 = vset.pattern.permute.xlu0 0
    %643 = vperm.xlu0 %642, %v641
    %v644 = vpop.permute.xlu0 %643
    %v646 = vadd.f32 %v633, %v644
    %v647 = vadd.f32 %v636, %v644
    %v650 = vlaneseq
    %v651 = vshrl.u32 %v650, 7
    %v652 = vsub.s32 %v229, %v651
    %v653 = vrot.slane %v646, %v652
    %v654 = vlaneseq
    %v655 = vshrl.u32 %v654, 7
    %v656 = vsub.s32 %v229, %v655
    %v657 = vrot.slane %v647, %v656
    %vm658 = vcmask 1041409
    %v659 = vsel %vm658, %v657, %v653
    %v661 = vsel %vm234, %v659, -1e+30
    %vm662 = vcmask 58368
    %v663 = vsel %vm662, %v661, -inf
    %664 = vmax.xlane.f32.xlu0 %v663
    %v665 = vpop.xlane.xlu0 %664
    %v666 = vsub.f32 %v661, %v665
    %v667 = vmul.f32 %v666, 1.442695
    %v668 = vpow.pop %v667
    %v669 = vsel %vm662, %v668, 0.0
    %670 = vadd.xlane.f32.xlu0 %v669
    %v671 = vpop.xlane.xlu0 %670
    %v672 = vrcp.pop %v671
    %v673 = vmul.f32 %v668, %v672
    %v674 = vlaneseq
    %v675 = vshrl.u32 %v674, 7
    %v676 = vsub.s32 0, %v675
    %v677 = vrot.slane %v673, %v676
    %679 = vbcast.lane.b32.xlu0 %v677, 256
    %v680 = vpop.permute.xlu0 %679
    %v681 = vlaneseq
    %v682 = vshrl.u32 %v681, 7
    %v683 = vsub.s32 1, %v682
    %v684 = vrot.slane %v673, %v683
    %686 = vbcast.lane.b32.xlu0 %v684, 256
    %v687 = vpop.permute.xlu0 %686
    %v688 = vmul.f32 %v141, %v680
    %v689 = vmul.f32 %v142, %v687
    %v690 = vsel %vm154, %v688, 0.0
    %v691 = vrot.slane %v690, 4
    %v692 = vadd.f32 %v690, %v691
    %v693 = vrot.slane %v692, 2
    %v694 = vadd.f32 %v692, %v693
    %v695 = vrot.slane %v694, 1
    %v696 = vadd.f32 %v694, %v695
    %v697 = vsel %vm154, %v689, 0.0
    %v698 = vrot.slane %v697, 4
    %v699 = vadd.f32 %v697, %v698
    %v700 = vrot.slane %v699, 2
    %v701 = vadd.f32 %v699, %v700
    %v702 = vrot.slane %v701, 1
    %v703 = vadd.f32 %v701, %v702
    %v706 = vsel %vm658, %v703, %v696
    %vm708 = vcmask 254976
    %709 = vst.msk [vmem:[#allocation17] sm:$0x3] %vm708, %v706
    %710 = vst.msk [vmem:[#allocation18] sm:$0x3] %vm662, %v673
    %v711 = vsel %vm154, %v706, 0
    %713 = vmatprep.subr.mxu0 0.0
    %714 = vmatpush1.msra.mxu0 %v241
    %715 = vmatprep.subr.mxu0 0.0
    %716 = vmatpush1.msra.mxu0 %v242
    %717 = vmatprep.subr.mxu0 0.0
    %718 = vmatpush1.msra.mxu0 %v243
    %719 = vmatprep.subr.mxu0 0.0
    %720 = vmatpush1.msra.mxu0 %v244
    %721 = vmatprep.subr.mxu0 0.0
    %722 = vmatpush1.msra.mxu0 0.0
    %723 = vmatprep.subr.mxu0 0.0
    %724 = vmatpush1.msra.mxu0 0.0
    %725 = vmatprep.subr.mxu0 0.0
    %726 = vmatpush1.msra.mxu0 0.0
    %727 = vmatprep.subr.mxu0 0.0
    %728 = vmatpush1.msra.mxu0 0.0
    %729 = vmatprep.subr.mxu0 0.0
    %730 = vmatpush1.msra.mxu0 0.0
    %731 = vmatprep.subr.mxu0 0.0
    %732 = vmatpush1.msra.mxu0 0.0
    %733 = vmatprep.subr.mxu0 0.0
    %734 = vmatpush1.msra.mxu0 0.0
    %735 = vmatprep.subr.mxu0 0.0
    %736 = vmatpush1.msra.mxu0 0.0
    %737 = vmatprep.subr.mxu0 0.0
    %738 = vmatpush1.msra.mxu0 0.0
    %739 = vmatprep.subr.mxu0 0.0
    %740 = vmatpush1.msra.mxu0 0.0
    %741 = vmatprep.subr.mxu0 0.0
    %742 = vmatpush1.msra.mxu0 0.0
    %743 = vmatprep.subr.mxu0 0.0
    %744 = vmatpush1.msra.mxu0 0.0
    %745 = vmatprep.subr.mxu0 0.0
    %746 = vmatpush1.msra.mxu0 0.0
    %747 = vmatprep.subr.mxu0 0.0
    %748 = vmatpush1.msra.mxu0 0.0
    %749 = vmatprep.subr.mxu0 0.0
    %750 = vmatpush1.msra.mxu0 0.0
    %751 = vmatprep.subr.mxu0 0.0
    %752 = vmatpush1.msra.mxu0 0.0
    %753 = vmatprep.subr.mxu0 0.0
    %754 = vmatpush1.msra.mxu0 0.0
    %755 = vmatprep.subr.mxu0 0.0
    %756 = vmatpush1.msra.mxu0 0.0
    %757 = vmatprep.subr.mxu0 0.0
    %758 = vmatpush1.msra.mxu0 0.0
    %759 = vmatprep.subr.mxu0 0.0
    %760 = vmatpush1.msra.mxu0 0.0
    %761 = vmatprep.subr.mxu0 0.0
    %762 = vmatpush1.msra.mxu0 0.0
    %763 = vmatprep.subr.mxu0 0.0
    %764 = vmatpush1.msra.mxu0 0.0
    %765 = vmatprep.subr.mxu0 0.0
    %766 = vmatpush1.msra.mxu0 0.0
    %767 = vmatprep.subr.mxu0 0.0
    %768 = vmatpush1.msra.mxu0 0.0
    %769 = vmatprep.subr.mxu0 0.0
    %770 = vmatpush1.msra.mxu0 0.0
    %771 = vmatprep.subr.mxu0 0.0
    %772 = vmatpush1.msra.mxu0 0.0
    %773 = vmatprep.subr.mxu0 0.0
    %774 = vmatpush1.msra.mxu0 0.0
    %775 = vmatprep.subr.mxu0 0.0
    %776 = vmatpush1.msra.mxu0 0.0
    %777 = vmatprep.mubr.f32.mxu0 0.0
    %778 = vmatmul.mubr.f32.gmra.mrb[0].mxu0 %v711
    %v779 = vpop.f32.mrb[0].mxu0
    %v780 = vadd.f32 0.0, %v779
    %v781 = vpop.f32.mrb[0].mxu0
    %782 = vdwg.mxu0
    %783 = vrot.lane.b32.xlu0 %v225, 96
    %v784 = vpop.permute.xlu0 %783
    %v785 = vsel %vm154, %v784, 0
    %787 = vmatprep.subr.mxu0 0.0
    %788 = vmatpush1.msra.mxu0 %v237
    %789 = vmatprep.subr.mxu0 0.0
    %790 = vmatpush1.msra.mxu0 %v238
    %791 = vmatprep.subr.mxu0 0.0
    %792 = vmatpush1.msra.mxu0 %v239
    %793 = vmatprep.subr.mxu0 0.0
    %794 = vmatpush1.msra.mxu0 %v240
    %795 = vmatprep.subr.mxu0 0.0
    %796 = vmatpush1.msra.mxu0 0.0
    %797 = vmatprep.subr.mxu0 0.0
    %798 = vmatpush1.msra.mxu0 0.0
    %799 = vmatprep.subr.mxu0 0.0
    %800 = vmatpush1.msra.mxu0 0.0
    %801 = vmatprep.subr.mxu0 0.0
    %802 = vmatpush1.msra.mxu0 0.0
    %803 = vmatprep.subr.mxu0 0.0
    %804 = vmatpush1.msra.mxu0 0.0
    %805 = vmatprep.subr.mxu0 0.0
    %806 = vmatpush1.msra.mxu0 0.0
    %807 = vmatprep.subr.mxu0 0.0
    %808 = vmatpush1.msra.mxu0 0.0
    %809 = vmatprep.subr.mxu0 0.0
    %810 = vmatpush1.msra.mxu0 0.0
    %811 = vmatprep.subr.mxu0 0.0
    %812 = vmatpush1.msra.mxu0 0.0
    %813 = vmatprep.subr.mxu0 0.0
    %814 = vmatpush1.msra.mxu0 0.0
    %815 = vmatprep.subr.mxu0 0.0
    %816 = vmatpush1.msra.mxu0 0.0
    %817 = vmatprep.subr.mxu0 0.0
    %818 = vmatpush1.msra.mxu0 0.0
    %819 = vmatprep.subr.mxu0 0.0
    %820 = vmatpush1.msra.mxu0 0.0
    %821 = vmatprep.subr.mxu0 0.0
    %822 = vmatpush1.msra.mxu0 0.0
    %823 = vmatprep.subr.mxu0 0.0
    %824 = vmatpush1.msra.mxu0 0.0
    %825 = vmatprep.subr.mxu0 0.0
    %826 = vmatpush1.msra.mxu0 0.0
    %827 = vmatprep.subr.mxu0 0.0
    %828 = vmatpush1.msra.mxu0 0.0
    %829 = vmatprep.subr.mxu0 0.0
    %830 = vmatpush1.msra.mxu0 0.0
    %831 = vmatprep.subr.mxu0 0.0
    %832 = vmatpush1.msra.mxu0 0.0
    %833 = vmatprep.subr.mxu0 0.0
    %834 = vmatpush1.msra.mxu0 0.0
    %835 = vmatprep.subr.mxu0 0.0
    %836 = vmatpush1.msra.mxu0 0.0
    %837 = vmatprep.subr.mxu0 0.0
    %838 = vmatpush1.msra.mxu0 0.0
    %839 = vmatprep.subr.mxu0 0.0
    %840 = vmatpush1.msra.mxu0 0.0
    %841 = vmatprep.subr.mxu0 0.0
    %842 = vmatpush1.msra.mxu0 0.0
    %843 = vmatprep.subr.mxu0 0.0
    %844 = vmatpush1.msra.mxu0 0.0
    %845 = vmatprep.subr.mxu0 0.0
    %846 = vmatpush1.msra.mxu0 0.0
    %847 = vmatprep.subr.mxu0 0.0
    %848 = vmatpush1.msra.mxu0 0.0
    %849 = vmatprep.subr.mxu0 0.0
    %850 = vmatpush1.msra.mxu0 0.0
    %851 = vmatprep.mubr.f32.mxu0 0.0
    %852 = vmatmul.mubr.f32.gmra.mrb[0].mxu0 %v785
    %v853 = vpop.f32.mrb[0].mxu0
    %v854 = vadd.f32 %v780, %v853
    %v855 = vpop.f32.mrb[0].mxu0
    %856 = vdwg.mxu0
    %v857 = vadd.f32 %v854, %v411
    %v859 = vsel %vm154, %v857, 0
    %861 = vmatprep.subr.mxu0 0.0
    %862 = vmatpush1.msra.mxu0 %v246
    %863 = vmatprep.subr.mxu0 0.0
    %864 = vmatpush1.msra.mxu0 %v247
    %865 = vmatprep.subr.mxu0 0.0
    %866 = vmatpush1.msra.mxu0 %v248
    %867 = vmatprep.subr.mxu0 0.0
    %868 = vmatpush1.msra.mxu0 %v249
    %869 = vmatprep.subr.mxu0 0.0
    %870 = vmatpush1.msra.mxu0 0.0
    %871 = vmatprep.subr.mxu0 0.0
    %872 = vmatpush1.msra.mxu0 0.0
    %873 = vmatprep.subr.mxu0 0.0
    %874 = vmatpush1.msra.mxu0 0.0
    %875 = vmatprep.subr.mxu0 0.0
    %876 = vmatpush1.msra.mxu0 0.0
    %877 = vmatprep.subr.mxu0 0.0
    %878 = vmatpush1.msra.mxu0 0.0
    %879 = vmatprep.subr.mxu0 0.0
    %880 = vmatpush1.msra.mxu0 0.0
    %881 = vmatprep.subr.mxu0 0.0
    %882 = vmatpush1.msra.mxu0 0.0
    %883 = vmatprep.subr.mxu0 0.0
    %884 = vmatpush1.msra.mxu0 0.0
    %885 = vmatprep.subr.mxu0 0.0
    %886 = vmatpush1.msra.mxu0 0.0
    %887 = vmatprep.subr.mxu0 0.0
    %888 = vmatpush1.msra.mxu0 0.0
    %889 = vmatprep.subr.mxu0 0.0
    %890 = vmatpush1.msra.mxu0 0.0
    %891 = vmatprep.subr.mxu0 0.0
    %892 = vmatpush1.msra.mxu0 0.0
    %893 = vmatprep.subr.mxu0 0.0
    %894 = vmatpush1.msra.mxu0 0.0
    %895 = vmatprep.subr.mxu0 0.0
    %896 = vmatpush1.msra.mxu0 0.0
    %897 = vmatprep.subr.mxu0 0.0
    %898 = vmatpush1.msra.mxu0 0.0
    %899 = vmatprep.subr.mxu0 0.0
    %900 = vmatpush1.msra.mxu0 0.0
    %901 = vmatprep.subr.mxu0 0.0
    %902 = vmatpush1.msra.mxu0 0.0
    %903 = vmatprep.subr.mxu0 0.0
    %904 = vmatpush1.msra.mxu0 0.0
    %905 = vmatprep.subr.mxu0 0.0
    %906 = vmatpush1.msra.mxu0 0.0
    %907 = vmatprep.subr.mxu0 0.0
    %908 = vmatpush1.msra.mxu0 0.0
    %909 = vmatprep.subr.mxu0 0.0
    %910 = vmatpush1.msra.mxu0 0.0
    %911 = vmatprep.subr.mxu0 0.0
    %912 = vmatpush1.msra.mxu0 0.0
    %913 = vmatprep.subr.mxu0 0.0
    %914 = vmatpush1.msra.mxu0 0.0
    %915 = vmatprep.subr.mxu0 0.0
    %916 = vmatpush1.msra.mxu0 0.0
    %917 = vmatprep.subr.mxu0 0.0
    %918 = vmatpush1.msra.mxu0 0.0
    %919 = vmatprep.subr.mxu0 0.0
    %920 = vmatpush1.msra.mxu0 0.0
    %921 = vmatprep.subr.mxu0 0.0
    %922 = vmatpush1.msra.mxu0 0.0
    %923 = vmatprep.subr.mxu0 0.0
    %924 = vmatpush1.msra.mxu0 0.0
    %925 = vmatprep.mubr.f32.mxu0 0.0
    %926 = vmatmul.mubr.f32.gmra.mrb[0].mxu0 %v859
    %v927 = vpop.f32.mrb[0].mxu0
    %v928 = vadd.f32 %v418, %v927
    %v929 = vpop.f32.mrb[0].mxu0
    %930 = vdwg.mxu0
    %v931 = vmax.f32 %v928, 0.0
    %v933 = vsel %vm154, %v931, 0
    %935 = vmatprep.subr.mxu0 0.0
    %936 = vmatpush1.msra.mxu0 %v251
    %937 = vmatprep.subr.mxu0 0.0
    %938 = vmatpush1.msra.mxu0 %v252
    %939 = vmatprep.subr.mxu0 0.0
    %940 = vmatpush1.msra.mxu0 %v253
    %941 = vmatprep.subr.mxu0 0.0
    %942 = vmatpush1.msra.mxu0 %v254
    %943 = vmatprep.subr.mxu0 0.0
    %944 = vmatpush1.msra.mxu0 0.0
    %945 = vmatprep.subr.mxu0 0.0
    %946 = vmatpush1.msra.mxu0 0.0
    %947 = vmatprep.subr.mxu0 0.0
    %948 = vmatpush1.msra.mxu0 0.0
    %949 = vmatprep.subr.mxu0 0.0
    %950 = vmatpush1.msra.mxu0 0.0
    %951 = vmatprep.subr.mxu0 0.0
    %952 = vmatpush1.msra.mxu0 0.0
    %953 = vmatprep.subr.mxu0 0.0
    %954 = vmatpush1.msra.mxu0 0.0
    %955 = vmatprep.subr.mxu0 0.0
    %956 = vmatpush1.msra.mxu0 0.0
    %957 = vmatprep.subr.mxu0 0.0
    %958 = vmatpush1.msra.mxu0 0.0
    %959 = vmatprep.subr.mxu0 0.0
    %960 = vmatpush1.msra.mxu0 0.0
    %961 = vmatprep.subr.mxu0 0.0
    %962 = vmatpush1.msra.mxu0 0.0
    %963 = vmatprep.subr.mxu0 0.0
    %964 = vmatpush1.msra.mxu0 0.0
    %965 = vmatprep.subr.mxu0 0.0
    %966 = vmatpush1.msra.mxu0 0.0
    %967 = vmatprep.subr.mxu0 0.0
    %968 = vmatpush1.msra.mxu0 0.0
    %969 = vmatprep.subr.mxu0 0.0
    %970 = vmatpush1.msra.mxu0 0.0
    %971 = vmatprep.subr.mxu0 0.0
    %972 = vmatpush1.msra.mxu0 0.0
    %973 = vmatprep.subr.mxu0 0.0
    %974 = vmatpush1.msra.mxu0 0.0
    %975 = vmatprep.subr.mxu0 0.0
    %976 = vmatpush1.msra.mxu0 0.0
    %977 = vmatprep.subr.mxu0 0.0
    %978 = vmatpush1.msra.mxu0 0.0
    %979 = vmatprep.subr.mxu0 0.0
    %980 = vmatpush1.msra.mxu0 0.0
    %981 = vmatprep.subr.mxu0 0.0
    %982 = vmatpush1.msra.mxu0 0.0
    %983 = vmatprep.subr.mxu0 0.0
    %984 = vmatpush1.msra.mxu0 0.0
    %985 = vmatprep.subr.mxu0 0.0
    %986 = vmatpush1.msra.mxu0 0.0
    %987 = vmatprep.subr.mxu0 0.0
    %988 = vmatpush1.msra.mxu0 0.0
    %989 = vmatprep.subr.mxu0 0.0
    %990 = vmatpush1.msra.mxu0 0.0
    %991 = vmatprep.subr.mxu0 0.0
    %992 = vmatpush1.msra.mxu0 0.0
    %993 = vmatprep.subr.mxu0 0.0
    %994 = vmatpush1.msra.mxu0 0.0
    %995 = vmatprep.subr.mxu0 0.0
    %996 = vmatpush1.msra.mxu0 0.0
    %997 = vmatprep.subr.mxu0 0.0
    %998 = vmatpush1.msra.mxu0 0.0
    %999 = vmatprep.mubr.f32.mxu0 0.0
    %1000 = vmatmul.mubr.f32.gmra.mrb[0].mxu0 %v933
    %v1001 = vpop.f32.mrb[0].mxu0
    %v1002 = vadd.f32 %v498, %v1001
    %v1003 = vpop.f32.mrb[0].mxu0
    %1004 = vdwg.mxu0
    %s1005 = scalar_lea.vmem [#allocation14], 2
    %1006 = vst.msk [vmem:[%s1005] sm:$0x3] %vm573, %v1002
    %s1007 = scalar_lea.vmem [#allocation6], 2
    %v1008 = vld [vmem:[%s1007] sm:$0x3]
    %v1009 = vadd.f32 %v1002, %v1008
    %v1010 = vsel %vm573, %v1009, -inf
    %1011 = vmax.xlane.f32.xlu0 %v1010
    %v1012 = vpop.xlane.xlu0 %1011
    %v1013 = vsub.f32 %v1009, %v1012
    %v1014 = vmul.f32 %v1013, 1.442695
    %v1015 = vpow.pop %v1014
    %v1016 = vsel %vm573, %v1015, 0.0
    %1017 = vadd.xlane.f32.xlu0 %v1016
    %v1018 = vpop.xlane.xlu0 %1017
    %v1019 = vrcp.pop %v1018
    %v1020 = vmul.f32 %v1015, %v1019
    %s1021 = scalar_lea.vmem [#allocation15], 2
    %1022 = vst.msk [vmem:[%s1021] sm:$0x3] %vm573, %v1020
    %v1023 = vmul.f32 %v857, %v593
    %v1026 = vunpack.c.l.s4 1966171168
    %v1027 = vunpack.c.0.s8 %v1026
    %v1028 = vlaneseq
    %v1029 = vshrl.u32 %v1028, 7
    %v1030 = vsub.s32 %v1027, %v1029
    %v1031 = vrot.slane %v1023, %v1030
    %v1032 = vcombine.high %v1031, %v1031
    %v1034 = vunpack.c.l.s4 1966171168
    %v1035 = vunpack.c.0.s8 %v1034
    %v1036 = vlaneseq
    %v1037 = vshrl.u32 %v1036, 7
    %v1038 = vsub.s32 %v1035, %v1037
    %v1039 = vrot.slane %v1031, %v1038
    %v1041 = vunpack.c.l.s4 1966171168
    %v1042 = vunpack.c.0.s8 %v1041
    %v1043 = vlaneseq
    %v1044 = vshrl.u32 %v1043, 7
    %v1045 = vsub.s32 %v1042, %v1044
    %v1046 = vrot.slane %v1032, %v1045
    %v1047 = vlaneseq
    %v1048 = vshrl.u32 %v1047, 7
    %v1049 = vsub.s32 0, %v1048
    %v1050 = vrot.slane %v1039, %v1049
    %v1051 = vlaneseq
    %v1052 = vshrl.u32 %v1051, 7
    %v1053 = vsub.s32 0, %v1052
    %v1054 = vrot.slane %v1046, %v1053
    %v1057 = vmul.f32 %v141, %v1050
    %v1058 = vmul.f32 %v142, %v1054
    %v1059 = vsel %vm154, %v1057, 0.0
    %1060 = vadd.xlane.f32.xlu0 %v1059
    %v1061 = vpop.xlane.xlu0 %1060
    %v1062 = vsel %vm154, %v1058, 0.0
    %1063 = vadd.xlane.f32.xlu0 %v1062
    %v1064 = vpop.xlane.xlu0 %1063
    %v1065 = vadd.f32 %v1061, %v644
    %v1066 = vadd.f32 %v1064, %v644
    %v1069 = vlaneseq
    %v1070 = vshrl.u32 %v1069, 7
    %v1071 = vsub.s32 %v229, %v1070
    %v1072 = vrot.slane %v1065, %v1071
    %v1073 = vlaneseq
    %v1074 = vshrl.u32 %v1073, 7
    %v1075 = vsub.s32 %v229, %v1074
    %v1076 = vrot.slane %v1066, %v1075
    %v1077 = vsel %vm658, %v1076, %v1072
    %v1079 = vsel %vm234, %v1077, -1e+30
    %v1080 = vsel %vm662, %v1079, -inf
    %1081 = vmax.xlane.f32.xlu0 %v1080
    %v1082 = vpop.xlane.xlu0 %1081
    %v1083 = vsub.f32 %v1079, %v1082
    %v1084 = vmul.f32 %v1083, 1.442695
    %v1085 = vpow.pop %v1084
    %v1086 = vsel %vm662, %v1085, 0.0
    %1087 = vadd.xlane.f32.xlu0 %v1086
    %v1088 = vpop.xlane.xlu0 %1087
    %v1089 = vrcp.pop %v1088
    %v1090 = vmul.f32 %v1085, %v1089
    %v1091 = vlaneseq
    %v1092 = vshrl.u32 %v1091, 7
    %v1093 = vsub.s32 0, %v1092
    %v1094 = vrot.slane %v1090, %v1093
    %1096 = vbcast.lane.b32.xlu0 %v1094, 256
    %v1097 = vpop.permute.xlu0 %1096
    %v1098 = vlaneseq
    %v1099 = vshrl.u32 %v1098, 7
    %v1100 = vsub.s32 1, %v1099
    %v1101 = vrot.slane %v1090, %v1100
    %1103 = vbcast.lane.b32.xlu0 %v1101, 256
    %v1104 = vpop.permute.xlu0 %1103
    %v1105 = vmul.f32 %v141, %v1097
    %v1106 = vmul.f32 %v142, %v1104
    %v1107 = vsel %vm154, %v1105, 0.0
    %v1108 = vrot.slane %v1107, 4
    %v1109 = vadd.f32 %v1107, %v1108
    %v1110 = vrot.slane %v1109, 2
    %v1111 = vadd.f32 %v1109, %v1110
    %v1112 = vrot.slane %v1111, 1
    %v1113 = vadd.f32 %v1111, %v1112
    %v1114 = vsel %vm154, %v1106, 0.0
    %v1115 = vrot.slane %v1114, 4
    %v1116 = vadd.f32 %v1114, %v1115
    %v1117 = vrot.slane %v1116, 2
    %v1118 = vadd.f32 %v1116, %v1117
    %v1119 = vrot.slane %v1118, 1
    %v1120 = vadd.f32 %v1118, %v1119
    %v1123 = vsel %vm658, %v1120, %v1113
    %s1125 = scalar_lea.vmem [#allocation17], 2
    %1126 = vst.msk [vmem:[%s1125] sm:$0x3] %vm708, %v1123
    %s1127 = scalar_lea.vmem [#allocation18], 2
    %1128 = vst.msk [vmem:[%s1127] sm:$0x3] %vm662, %v1090
    %v1129 = vsel %vm154, %v1123, 0
    %1131 = vmatprep.subr.mxu0 0.0
    %1132 = vmatpush1.msra.mxu0 %v241
    %1133 = vmatprep.subr.mxu0 0.0
    %1134 = vmatpush1.msra.mxu0 %v242
    %1135 = vmatprep.subr.mxu0 0.0
    %1136 = vmatpush1.msra.mxu0 %v243
    %1137 = vmatprep.subr.mxu0 0.0
    %1138 = vmatpush1.msra.mxu0 %v244
    %1139 = vmatprep.subr.mxu0 0.0
    %1140 = vmatpush1.msra.mxu0 0.0
    %1141 = vmatprep.subr.mxu0 0.0
    %1142 = vmatpush1.msra.mxu0 0.0
    %1143 = vmatprep.subr.mxu0 0.0
    %1144 = vmatpush1.msra.mxu0 0.0
    %1145 = vmatprep.subr.mxu0 0.0
    %1146 = vmatpush1.msra.mxu0 0.0
    %1147 = vmatprep.subr.mxu0 0.0
    %1148 = vmatpush1.msra.mxu0 0.0
    %1149 = vmatprep.subr.mxu0 0.0
    %1150 = vmatpush1.msra.mxu0 0.0
    %1151 = vmatprep.subr.mxu0 0.0
    %1152 = vmatpush1.msra.mxu0 0.0
    %1153 = vmatprep.subr.mxu0 0.0
    %1154 = vmatpush1.msra.mxu0 0.0
    %1155 = vmatprep.subr.mxu0 0.0
    %1156 = vmatpush1.msra.mxu0 0.0
    %1157 = vmatprep.subr.mxu0 0.0
    %1158 = vmatpush1.msra.mxu0 0.0
    %1159 = vmatprep.subr.mxu0 0.0
    %1160 = vmatpush1.msra.mxu0 0.0
    %1161 = vmatprep.subr.mxu0 0.0
    %1162 = vmatpush1.msra.mxu0 0.0
    %1163 = vmatprep.subr.mxu0 0.0
    %1164 = vmatpush1.msra.mxu0 0.0
    %1165 = vmatprep.subr.mxu0 0.0
    %1166 = vmatpush1.msra.mxu0 0.0
    %1167 = vmatprep.subr.mxu0 0.0
    %1168 = vmatpush1.msra.mxu0 0.0
    %1169 = vmatprep.subr.mxu0 0.0
    %1170 = vmatpush1.msra.mxu0 0.0
    %1171 = vmatprep.subr.mxu0 0.0
    %1172 = vmatpush1.msra.mxu0 0.0
    %1173 = vmatprep.subr.mxu0 0.0
    %1174 = vmatpush1.msra.mxu0 0.0
    %1175 = vmatprep.subr.mxu0 0.0
    %1176 = vmatpush1.msra.mxu0 0.0
    %1177 = vmatprep.subr.mxu0 0.0
    %1178 = vmatpush1.msra.mxu0 0.0
    %1179 = vmatprep.subr.mxu0 0.0
    %1180 = vmatpush1.msra.mxu0 0.0
    %1181 = vmatprep.subr.mxu0 0.0
    %1182 = vmatpush1.msra.mxu0 0.0
    %1183 = vmatprep.subr.mxu0 0.0
    %1184 = vmatpush1.msra.mxu0 0.0
    %1185 = vmatprep.subr.mxu0 0.0
    %1186 = vmatpush1.msra.mxu0 0.0
    %1187 = vmatprep.subr.mxu0 0.0
    %1188 = vmatpush1.msra.mxu0 0.0
    %1189 = vmatprep.subr.mxu0 0.0
    %1190 = vmatpush1.msra.mxu0 0.0
    %1191 = vmatprep.subr.mxu0 0.0
    %1192 = vmatpush1.msra.mxu0 0.0
    %1193 = vmatprep.subr.mxu0 0.0
    %1194 = vmatpush1.msra.mxu0 0.0
    %1195 = vmatprep.mubr.f32.mxu0 0.0
    %1196 = vmatmul.mubr.f32.gmra.mrb[0].mxu0 %v1129
    %v1197 = vpop.f32.mrb[0].mxu0
    %v1198 = vadd.f32 0.0, %v1197
    %v1199 = vpop.f32.mrb[0].mxu0
    %1200 = vdwg.mxu0
    %1201 = vrot.lane.b32.xlu0 %v225, 64
    %v1202 = vpop.permute.xlu0 %1201
    %v1203 = vsel %vm154, %v1202, 0
    %1205 = vmatprep.subr.mxu0 0.0
    %1206 = vmatpush1.msra.mxu0 %v237
    %1207 = vmatprep.subr.mxu0 0.0
    %1208 = vmatpush1.msra.mxu0 %v238
    %1209 = vmatprep.subr.mxu0 0.0
    %1210 = vmatpush1.msra.mxu0 %v239
    %1211 = vmatprep.subr.mxu0 0.0
    %1212 = vmatpush1.msra.mxu0 %v240
    %1213 = vmatprep.subr.mxu0 0.0
    %1214 = vmatpush1.msra.mxu0 0.0
    %1215 = vmatprep.subr.mxu0 0.0
    %1216 = vmatpush1.msra.mxu0 0.0
    %1217 = vmatprep.subr.mxu0 0.0
    %1218 = vmatpush1.msra.mxu0 0.0
    %1219 = vmatprep.subr.mxu0 0.0
    %1220 = vmatpush1.msra.mxu0 0.0
    %1221 = vmatprep.subr.mxu0 0.0
    %1222 = vmatpush1.msra.mxu0 0.0
    %1223 = vmatprep.subr.mxu0 0.0
    %1224 = vmatpush1.msra.mxu0 0.0
    %1225 = vmatprep.subr.mxu0 0.0
    %1226 = vmatpush1.msra.mxu0 0.0
    %1227 = vmatprep.subr.mxu0 0.0
    %1228 = vmatpush1.msra.mxu0 0.0
    %1229 = vmatprep.subr.mxu0 0.0
    %1230 = vmatpush1.msra.mxu0 0.0
    %1231 = vmatprep.subr.mxu0 0.0
    %1232 = vmatpush1.msra.mxu0 0.0
    %1233 = vmatprep.subr.mxu0 0.0
    %1234 = vmatpush1.msra.mxu0 0.0
    %1235 = vmatprep.subr.mxu0 0.0
    %1236 = vmatpush1.msra.mxu0 0.0
    %1237 = vmatprep.subr.mxu0 0.0
    %1238 = vmatpush1.msra.mxu0 0.0
    %1239 = vmatprep.subr.mxu0 0.0
    %1240 = vmatpush1.msra.mxu0 0.0
    %1241 = vmatprep.subr.mxu0 0.0
    %1242 = vmatpush1.msra.mxu0 0.0
    %1243 = vmatprep.subr.mxu0 0.0
    %1244 = vmatpush1.msra.mxu0 0.0
    %1245 = vmatprep.subr.mxu0 0.0
    %1246 = vmatpush1.msra.mxu0 0.0
    %1247 = vmatprep.subr.mxu0 0.0
    %1248 = vmatpush1.msra.mxu0 0.0
    %1249 = vmatprep.subr.mxu0 0.0
    %1250 = vmatpush1.msra.mxu0 0.0
    %1251 = vmatprep.subr.mxu0 0.0
    %1252 = vmatpush1.msra.mxu0 0.0
    %1253 = vmatprep.subr.mxu0 0.0
    %1254 = vmatpush1.msra.mxu0 0.0
    %1255 = vmatprep.subr.mxu0 0.0
    %1256 = vmatpush1.msra.mxu0 0.0
    %1257 = vmatprep.subr.mxu0 0.0
    %1258 = vmatpush1.msra.mxu0 0.0
    %1259 = vmatprep.subr.mxu0 0.0
    %1260 = vmatpush1.msra.mxu0 0.0
    %1261 = vmatprep.subr.mxu0 0.0
    %1262 = vmatpush1.msra.mxu0 0.0
    %1263 = vmatprep.subr.mxu0 0.0
    %1264 = vmatpush1.msra.mxu0 0.0
    %1265 = vmatprep.subr.mxu0 0.0
    %1266 = vmatpush1.msra.mxu0 0.0
    %1267 = vmatprep.subr.mxu0 0.0
    %1268 = vmatpush1.msra.mxu0 0.0
    %1269 = vmatprep.mubr.f32.mxu0 0.0
    %1270 = vmatmul.mubr.f32.gmra.mrb[0].mxu0 %v1203
    %v1271 = vpop.f32.mrb[0].mxu0
    %v1272 = vadd.f32 %v1198, %v1271
    %v1273 = vpop.f32.mrb[0].mxu0
    %1274 = vdwg.mxu0
    %v1275 = vadd.f32 %v1272, %v411
    %v1277 = vsel %vm154, %v1275, 0
    %1279 = vmatprep.subr.mxu0 0.0
    %1280 = vmatpush1.msra.mxu0 %v246
    %1281 = vmatprep.subr.mxu0 0.0
    %1282 = vmatpush1.msra.mxu0 %v247
    %1283 = vmatprep.subr.mxu0 0.0
    %1284 = vmatpush1.msra.mxu0 %v248
    %1285 = vmatprep.subr.mxu0 0.0
    %1286 = vmatpush1.msra.mxu0 %v249
    %1287 = vmatprep.subr.mxu0 0.0
    %1288 = vmatpush1.msra.mxu0 0.0
    %1289 = vmatprep.subr.mxu0 0.0
    %1290 = vmatpush1.msra.mxu0 0.0
    %1291 = vmatprep.subr.mxu0 0.0
    %1292 = vmatpush1.msra.mxu0 0.0
    %1293 = vmatprep.subr.mxu0 0.0
    %1294 = vmatpush1.msra.mxu0 0.0
    %1295 = vmatprep.subr.mxu0 0.0
    %1296 = vmatpush1.msra.mxu0 0.0
    %1297 = vmatprep.subr.mxu0 0.0
    %1298 = vmatpush1.msra.mxu0 0.0
    %1299 = vmatprep.subr.mxu0 0.0
    %1300 = vmatpush1.msra.mxu0 0.0
    %1301 = vmatprep.subr.mxu0 0.0
    %1302 = vmatpush1.msra.mxu0 0.0
    %1303 = vmatprep.subr.mxu0 0.0
    %1304 = vmatpush1.msra.mxu0 0.0
    %1305 = vmatprep.subr.mxu0 0.0
    %1306 = vmatpush1.msra.mxu0 0.0
    %1307 = vmatprep.subr.mxu0 0.0
    %1308 = vmatpush1.msra.mxu0 0.0
    %1309 = vmatprep.subr.mxu0 0.0
    %1310 = vmatpush1.msra.mxu0 0.0
    %1311 = vmatprep.subr.mxu0 0.0
    %1312 = vmatpush1.msra.mxu0 0.0
    %1313 = vmatprep.subr.mxu0 0.0
    %1314 = vmatpush1.msra.mxu0 0.0
    %1315 = vmatprep.subr.mxu0 0.0
    %1316 = vmatpush1.msra.mxu0 0.0
    %1317 = vmatprep.subr.mxu0 0.0
    %1318 = vmatpush1.msra.mxu0 0.0
    %1319 = vmatprep.subr.mxu0 0.0
    %1320 = vmatpush1.msra.mxu0 0.0
    %1321 = vmatprep.subr.mxu0 0.0
    %1322 = vmatpush1.msra.mxu0 0.0
    %1323 = vmatprep.subr.mxu0 0.0
    %1324 = vmatpush1.msra.mxu0 0.0
    %1325 = vmatprep.subr.mxu0 0.0
    %1326 = vmatpush1.msra.mxu0 0.0
    %1327 = vmatprep.subr.mxu0 0.0
    %1328 = vmatpush1.msra.mxu0 0.0
    %1329 = vmatprep.subr.mxu0 0.0
    %1330 = vmatpush1.msra.mxu0 0.0
    %1331 = vmatprep.subr.mxu0 0.0
    %1332 = vmatpush1.msra.mxu0 0.0
    %1333 = vmatprep.subr.mxu0 0.0
    %1334 = vmatpush1.msra.mxu0 0.0
    %1335 = vmatprep.subr.mxu0 0.0
    %1336 = vmatpush1.msra.mxu0 0.0
    %1337 = vmatprep.subr.mxu0 0.0
    %1338 = vmatpush1.msra.mxu0 0.0
    %1339 = vmatprep.subr.mxu0 0.0
    %1340 = vmatpush1.msra.mxu0 0.0
    %1341 = vmatprep.subr.mxu0 0.0
    %1342 = vmatpush1.msra.mxu0 0.0
    %1343 = vmatprep.mubr.f32.mxu0 0.0
    %1344 = vmatmul.mubr.f32.gmra.mrb[0].mxu0 %v1277
    %v1345 = vpop.f32.mrb[0].mxu0
    %v1346 = vadd.f32 %v418, %v1345
    %v1347 = vpop.f32.mrb[0].mxu0
    %1348 = vdwg.mxu0
    %v1349 = vmax.f32 %v1346, 0.0
    %v1351 = vsel %vm154, %v1349, 0
    %1353 = vmatprep.subr.mxu0 0.0
    %1354 = vmatpush1.msra.mxu0 %v251
    %1355 = vmatprep.subr.mxu0 0.0
    %1356 = vmatpush1.msra.mxu0 %v252
    %1357 = vmatprep.subr.mxu0 0.0
    %1358 = vmatpush1.msra.mxu0 %v253
    %1359 = vmatprep.subr.mxu0 0.0
    %1360 = vmatpush1.msra.mxu0 %v254
    %1361 = vmatprep.subr.mxu0 0.0
    %1362 = vmatpush1.msra.mxu0 0.0
    %1363 = vmatprep.subr.mxu0 0.0
    %1364 = vmatpush1.msra.mxu0 0.0
    %1365 = vmatprep.subr.mxu0 0.0
    %1366 = vmatpush1.msra.mxu0 0.0
    %1367 = vmatprep.subr.mxu0 0.0
    %1368 = vmatpush1.msra.mxu0 0.0
    %1369 = vmatprep.subr.mxu0 0.0
    %1370 = vmatpush1.msra.mxu0 0.0
    %1371 = vmatprep.subr.mxu0 0.0
    %1372 = vmatpush1.msra.mxu0 0.0
    %1373 = vmatprep.subr.mxu0 0.0
    %1374 = vmatpush1.msra.mxu0 0.0
    %1375 = vmatprep.subr.mxu0 0.0
    %1376 = vmatpush1.msra.mxu0 0.0
    %1377 = vmatprep.subr.mxu0 0.0
    %1378 = vmatpush1.msra.mxu0 0.0
    %1379 = vmatprep.subr.mxu0 0.0
    %1380 = vmatpush1.msra.mxu0 0.0
    %1381 = vmatprep.subr.mxu0 0.0
    %1382 = vmatpush1.msra.mxu0 0.0
    %1383 = vmatprep.subr.mxu0 0.0
    %1384 = vmatpush1.msra.mxu0 0.0
    %1385 = vmatprep.subr.mxu0 0.0
    %1386 = vmatpush1.msra.mxu0 0.0
    %1387 = vmatprep.subr.mxu0 0.0
    %1388 = vmatpush1.msra.mxu0 0.0
    %1389 = vmatprep.subr.mxu0 0.0
    %1390 = vmatpush1.msra.mxu0 0.0
    %1391 = vmatprep.subr.mxu0 0.0
    %1392 = vmatpush1.msra.mxu0 0.0
    %1393 = vmatprep.subr.mxu0 0.0
    %1394 = vmatpush1.msra.mxu0 0.0
    %1395 = vmatprep.subr.mxu0 0.0
    %1396 = vmatpush1.msra.mxu0 0.0
    %1397 = vmatprep.subr.mxu0 0.0
    %1398 = vmatpush1.msra.mxu0 0.0
    %1399 = vmatprep.subr.mxu0 0.0
    %1400 = vmatpush1.msra.mxu0 0.0
    %1401 = vmatprep.subr.mxu0 0.0
    %1402 = vmatpush1.msra.mxu0 0.0
    %1403 = vmatprep.subr.mxu0 0.0
    %1404 = vmatpush1.msra.mxu0 0.0
    %1405 = vmatprep.subr.mxu0 0.0
    %1406 = vmatpush1.msra.mxu0 0.0
    %1407 = vmatprep.subr.mxu0 0.0
    %1408 = vmatpush1.msra.mxu0 0.0
    %1409 = vmatprep.subr.mxu0 0.0
    %1410 = vmatpush1.msra.mxu0 0.0
    %1411 = vmatprep.subr.mxu0 0.0
    %1412 = vmatpush1.msra.mxu0 0.0
    %1413 = vmatprep.subr.mxu0 0.0
    %1414 = vmatpush1.msra.mxu0 0.0
    %1415 = vmatprep.subr.mxu0 0.0
    %1416 = vmatpush1.msra.mxu0 0.0
    %1417 = vmatprep.mubr.f32.mxu0 0.0
    %1418 = vmatmul.mubr.f32.gmra.mrb[0].mxu0 %v1351
    %v1419 = vpop.f32.mrb[0].mxu0
    %v1420 = vadd.f32 %v498, %v1419
    %v1421 = vpop.f32.mrb[0].mxu0
    %1422 = vdwg.mxu0
    %s1423 = scalar_lea.vmem [#allocation14], 4
    %1424 = vst.msk [vmem:[%s1423] sm:$0x3] %vm573, %v1420
    %s1425 = scalar_lea.vmem [#allocation6], 4
    %v1426 = vld [vmem:[%s1425] sm:$0x3]
    %v1427 = vadd.f32 %v1420, %v1426
    %v1428 = vsel %vm573, %v1427, -inf
    %1429 = vmax.xlane.f32.xlu0 %v1428
    %v1430 = vpop.xlane.xlu0 %1429
    %v1431 = vsub.f32 %v1427, %v1430
    %v1432 = vmul.f32 %v1431, 1.442695
    %v1433 = vpow.pop %v1432
    %v1434 = vsel %vm573, %v1433, 0.0
    %1435 = vadd.xlane.f32.xlu0 %v1434
    %v1436 = vpop.xlane.xlu0 %1435
    %v1437 = vrcp.pop %v1436
    %v1438 = vmul.f32 %v1433, %v1437
    %s1439 = scalar_lea.vmem [#allocation15], 4
    %1440 = vst.msk [vmem:[%s1439] sm:$0x3] %vm573, %v1438
    %v1441 = vmul.f32 %v1275, %v593
    %v1444 = vunpack.c.l.s4 1966171168
    %v1445 = vunpack.c.0.s8 %v1444
    %v1446 = vlaneseq
    %v1447 = vshrl.u32 %v1446, 7
    %v1448 = vsub.s32 %v1445, %v1447
    %v1449 = vrot.slane %v1441, %v1448
    %v1450 = vcombine.high %v1449, %v1449
    %v1452 = vunpack.c.l.s4 1966171168
    %v1453 = vunpack.c.0.s8 %v1452
    %v1454 = vlaneseq
    %v1455 = vshrl.u32 %v1454, 7
    %v1456 = vsub.s32 %v1453, %v1455
    %v1457 = vrot.slane %v1449, %v1456
    %v1459 = vunpack.c.l.s4 1966171168
    %v1460 = vunpack.c.0.s8 %v1459
    %v1461 = vlaneseq
    %v1462 = vshrl.u32 %v1461, 7
    %v1463 = vsub.s32 %v1460, %v1462
    %v1464 = vrot.slane %v1450, %v1463
    %v1465 = vlaneseq
    %v1466 = vshrl.u32 %v1465, 7
    %v1467 = vsub.s32 0, %v1466
    %v1468 = vrot.slane %v1457, %v1467
    %v1469 = vlaneseq
    %v1470 = vshrl.u32 %v1469, 7
    %v1471 = vsub.s32 0, %v1470
    %v1472 = vrot.slane %v1464, %v1471
    %v1475 = vmul.f32 %v141, %v1468
    %v1476 = vmul.f32 %v142, %v1472
    %v1477 = vsel %vm154, %v1475, 0.0
    %1478 = vadd.xlane.f32.xlu0 %v1477
    %v1479 = vpop.xlane.xlu0 %1478
    %v1480 = vsel %vm154, %v1476, 0.0
    %1481 = vadd.xlane.f32.xlu0 %v1480
    %v1482 = vpop.xlane.xlu0 %1481
    %v1483 = vadd.f32 %v1479, %v644
    %v1484 = vadd.f32 %v1482, %v644
    %v1487 = vlaneseq
    %v1488 = vshrl.u32 %v1487, 7
    %v1489 = vsub.s32 %v229, %v1488
    %v1490 = vrot.slane %v1483, %v1489
    %v1491 = vlaneseq
    %v1492 = vshrl.u32 %v1491, 7
    %v1493 = vsub.s32 %v229, %v1492
    %v1494 = vrot.slane %v1484, %v1493
    %v1495 = vsel %vm658, %v1494, %v1490
    %v1497 = vsel %vm234, %v1495, -1e+30
    %v1498 = vsel %vm662, %v1497, -inf
    %1499 = vmax.xlane.f32.xlu0 %v1498
    %v1500 = vpop.xlane.xlu0 %1499
    %v1501 = vsub.f32 %v1497, %v1500
    %v1502 = vmul.f32 %v1501, 1.442695
    %v1503 = vpow.pop %v1502
    %v1504 = vsel %vm662, %v1503, 0.0
    %1505 = vadd.xlane.f32.xlu0 %v1504
    %v1506 = vpop.xlane.xlu0 %1505
    %v1507 = vrcp.pop %v1506
    %v1508 = vmul.f32 %v1503, %v1507
    %v1509 = vlaneseq
    %v1510 = vshrl.u32 %v1509, 7
    %v1511 = vsub.s32 0, %v1510
    %v1512 = vrot.slane %v1508, %v1511
    %1514 = vbcast.lane.b32.xlu0 %v1512, 256
    %v1515 = vpop.permute.xlu0 %1514
    %v1516 = vlaneseq
    %v1517 = vshrl.u32 %v1516, 7
    %v1518 = vsub.s32 1, %v1517
    %v1519 = vrot.slane %v1508, %v1518
    %1521 = vbcast.lane.b32.xlu0 %v1519, 256
    %v1522 = vpop.permute.xlu0 %1521
    %v1523 = vmul.f32 %v141, %v1515
    %v1524 = vmul.f32 %v142, %v1522
    %v1525 = vsel %vm154, %v1523, 0.0
    %v1526 = vrot.slane %v1525, 4
    %v1527 = vadd.f32 %v1525, %v1526
    %v1528 = vrot.slane %v1527, 2
    %v1529 = vadd.f32 %v1527, %v1528
    %v1530 = vrot.slane %v1529, 1
    %v1531 = vadd.f32 %v1529, %v1530
    %v1532 = vsel %vm154, %v1524, 0.0
    %v1533 = vrot.slane %v1532, 4
    %v1534 = vadd.f32 %v1532, %v1533
    %v1535 = vrot.slane %v1534, 2
    %v1536 = vadd.f32 %v1534, %v1535
    %v1537 = vrot.slane %v1536, 1
    %v1538 = vadd.f32 %v1536, %v1537
    %v1541 = vsel %vm658, %v1538, %v1531
    %s1543 = scalar_lea.vmem [#allocation17], 4
    %1544 = vst.msk [vmem:[%s1543] sm:$0x3] %vm708, %v1541
    %s1545 = scalar_lea.vmem [#allocation18], 4
    %1546 = vst.msk [vmem:[%s1545] sm:$0x3] %vm662, %v1508
    // Predicated region
    $region90: #{tpu_custom_call.1} parent=1 // pred_check
      _
    $region91: #{tpu_custom_call.1} parent=1 // pred_check_branch
      %1548 = sbr.rel (0) target = $region93
    $region92: #{tpu_custom_call.1} parent=1 // pred_region
      %s1550 = ssub.s32 96, 96
      %1551 = vsyncadd [#allocation5], %s1550
      %s1552 = sshll.u32 [#allocation14], 4
      %s1553 = int_to_ptr.vmem [resolvable:$true] %s1552
      %1558 = dma.vmem_to_hbm [thread:$0]  %s1553, 96, %s16, [#allocation5], 32, 32, 2
    $region93: #{tpu_custom_call.1} parent=1 // pred_fallthru
      _
    // Predicated region
    $region94: #{tpu_custom_call.1} parent=1 // pred_check
      _
    $region95: #{tpu_custom_call.1} parent=1 // pred_check_branch
      %1560 = sbr.rel (0) target = $region97
    $region96: #{tpu_custom_call.1} parent=1 // pred_region
      %s1562 = ssub.s32 96, 96
      %1563 = vsyncadd [#allocation16], %s1562
      %s1564 = sshll.u32 [#allocation15], 4
      %s1565 = int_to_ptr.vmem [resolvable:$true] %s1564
      %1570 = dma.vmem_to_hbm [thread:$0]  %s1565, 96, %s17, [#allocation16], 32, 32, 2
    $region97: #{tpu_custom_call.1} parent=1 // pred_fallthru
      _
    // Predicated region
    $region98: #{tpu_custom_call.1} parent=1 // pred_check
      _
    $region99: #{tpu_custom_call.1} parent=1 // pred_check_branch
      %1572 = sbr.rel (0) target = $region101
    $region100: #{tpu_custom_call.1} parent=1 // pred_region
      %s1574 = ssub.s32 96, 96
      %1575 = vsyncadd [#allocation16], %s1574
      %s1576 = sshll.u32 [#allocation17], 4
      %s1577 = int_to_ptr.vmem [resolvable:$true] %s1576
      %1582 = dma.vmem_to_hbm [thread:$0]  %s1577, 96, %s18, [#allocation16], 32, 32, 2
    $region101: #{tpu_custom_call.1} parent=1 // pred_fallthru
      _
    // Predicated region
    $region102: #{tpu_custom_call.1} parent=1 // pred_check
      _
    $region103: #{tpu_custom_call.1} parent=1 // pred_check_branch
      %1584 = sbr.rel (0) target = $region105
    $region104: #{tpu_custom_call.1} parent=1 // pred_region
      %s1586 = ssub.s32 96, 96
      %1587 = vsyncadd [#allocation19], %s1586
      %s1588 = sshll.u32 [#allocation18], 4
      %s1589 = int_to_ptr.vmem [resolvable:$true] %s1588
      %1594 = dma.vmem_to_hbm [thread:$0]  %s1589, 96, %s19, [#allocation19], 32, 32, 2
    $region105: #{tpu_custom_call.1} parent=1 // pred_fallthru
      _
    // Predicated region
    $region106: #{tpu_custom_call.1} parent=1 // pred_check
      _
    $region107: #{tpu_custom_call.1} parent=1 // pred_check_branch
      %1596 = sbr.rel (0) target = $region109
    $region108: #{tpu_custom_call.1} parent=1 // pred_region
      %1597 = dma.done [#allocation5], 96
    $region109: #{tpu_custom_call.1} parent=1 // pred_fallthru
      _
    // Predicated region
    $region110: #{tpu_custom_call.1} parent=1 // pred_check
      _
    $region111: #{tpu_custom_call.1} parent=1 // pred_check_branch
      %1599 = sbr.rel (0) target = $region113
    $region112: #{tpu_custom_call.1} parent=1 // pred_region
      %1600 = dma.done [#allocation16], 96
    $region113: #{tpu_custom_call.1} parent=1 // pred_fallthru
      _
    // Predicated region
    $region114: #{tpu_custom_call.1} parent=1 // pred_check
      _
    $region115: #{tpu_custom_call.1} parent=1 // pred_check_branch
      %1602 = sbr.rel (0) target = $region117
    $region116: #{tpu_custom_call.1} parent=1 // pred_region
      %1603 = dma.done [#allocation16], 96
    $region117: #{tpu_custom_call.1} parent=1 // pred_fallthru
      _
    // Predicated region
    $region118: #{tpu_custom_call.1} parent=1 // pred_check
      _
    $region119: #{tpu_custom_call.1} parent=1 // pred_check_branch
      %1605 = sbr.rel (0) target = $region121
    $region120: #{tpu_custom_call.1} parent=1 // pred_region
      %1606 = dma.done [#allocation19], 96
    $region121: #{tpu_custom_call.1} parent=1 // pred_fallthru
      _
    %1607 = vsyncpa [#allocation4], 1
    %1608 = vsyncpa [#allocation7], 1
    %1609 = vsyncpa [#allocation10], 1
    %1610 = vsyncpa [#allocation13], 1
    %1611 = vsyncpa [#allocation5], 1
    %1612 = vsyncpa [#allocation16], 1
    %1613 = vsyncpa [#allocation19], 1

</llo_original>
